<compile_context>
chip_gen: v7x
topology: tpu7x:2x2x1
jax: 0.10.0
libtpu: 0.0.40
codegen_flags: <defaults>
</compile_context>

<pallas_src>
import numpy as np
import jax
import jax.numpy as jnp
from jax.experimental import pallas as pl
from jax.experimental.pallas import tpu as pltpu

f32 = jnp.float32


def _rup8(v):
    return (v + 7) // 8 * 8


# --------------------------------------------------------------------------
# parameters
# --------------------------------------------------------------------------
def fold_bn(gamma, beta, mean, var, eps=1e-5):
    scale = gamma / jnp.sqrt(var + eps)
    shift = beta - mean * scale
    return scale, shift


def init_params(key, C, Cr, K, P):
    ks = list(jax.random.split(key, 48))

    def nrm(shape, scale=0.2):
        return scale * jax.random.normal(ks.pop(), shape, f32)

    def bn(n):
        gamma = 1.0 + 0.1 * jax.random.normal(ks.pop(), (n,), f32)
        beta = 0.1 * jax.random.normal(ks.pop(), (n,), f32)
        mean = 0.1 * jax.random.normal(ks.pop(), (n,), f32)
        var = jax.random.uniform(ks.pop(), (n,), f32, minval=0.5, maxval=1.5)
        return fold_bn(gamma, beta, mean, var)

    p = {}
    p["bn1_scale"], p["bn1_shift"] = bn(C)
    p["w1"], p["b1"] = nrm((C, Cr)), nrm((Cr,))        # Conv2d C->Cr 1x1 (+bias)
    p["bn2_scale"], p["bn2_shift"] = bn(Cr)
    p["wc"] = nrm((K, Cr, Cr))                          # Volconv 1st-order, per tap (no bias)
    p["w2"] = nrm((P, Cr, Cr))                          # Volconv 2nd-order, per tap pair (no bias)
    p["bn3_scale"], p["bn3_shift"] = bn(Cr)
    p["w4"], p["b4"] = nrm((Cr, C)), nrm((C,))          # Conv2d Cr->C 1x1 (+bias)
    p["wq1"], p["bq1"] = nrm((C, Cr)), nrm((Cr,))       # sq branch conv1
    p["wq2"], p["bq2"] = nrm((Cr, C)), nrm((C,))        # sq branch conv2
    return p


# --------------------------------------------------------------------------
# host-side packing of weights + structural matrices
# --------------------------------------------------------------------------
def _wslab_layout(C, Cr, K, P):
    segs = [("w1t", C), ("wq1t", C), ("w2t", P * Cr), ("w4t", Cr), ("wq2t", Cr),
            ("bn1s", 1), ("bn1b", 1), ("b1", 1), ("b4", 1), ("bq1", 1), ("bq2", 1)]
    off, lay = 0, {}
    for name, w in segs:
        lay[name] = (off, w)
        off += w
    return lay, off


def pack_hla(params, *, in_size, kernel_size, pooling_size, padding):
    H, W = in_size
    p0, p1 = pooling_size
    kh, kw = kernel_size
    ph, pw = padding
    K, S, HW = kh * kw, p0 * p1, H * W
    P = K * (K + 1) // 2
    C, Cr = params["w1"].shape
    s0, s1 = H // p0, W // p1

    # adaptive avg-pool / nearest-upsample matrices (row-major hw = h*W + w)
    pool = np.zeros((HW, S), np.float32)      # (rows, HW) @ pool -> (rows, S)
    umat = np.zeros((S, HW), np.float32)      # (rows, S)  @ umat -> (rows, HW)
    for h in range(H):
        for w in range(W):
            s = (h // s0) * p1 + (w // s1)
            pool[h * W + w, s] = 1.0 / (s0 * s1)
            umat[s, h * W + w] = 1.0

    # tap-shift matrix with zero padding (per-sample): tap_t = h @ gt[:, t*S:(t+1)*S]
    gt = np.zeros((S, K * S), np.float32)
    t = 0
    for dy in range(kh):
        for dx in range(kw):
            for y in range(p0):
                for x in range(p1):
                    yy, xx = y + dy - ph, x + dx - pw
                    if 0 <= yy < p0 and 0 <= xx < p1:
                        gt[yy * p1 + xx, t * S + y * p1 + x] = 1.0
            t += 1

    # fold BN2 into conv1 and BN3 into conv4 (inference-mode statistics)
    bn2s, bn2b = np.asarray(params["bn2_scale"]), np.asarray(params["bn2_shift"])
    bn3s, bn3b = np.asarray(params["bn3_scale"]), np.asarray(params["bn3_shift"])
    w1, b1 = np.asarray(params["w1"]), np.asarray(params["b1"])
    w4, b4 = np.asarray(params["w4"]), np.asarray(params["b4"])
    w1t_eff = bn2s[:, None] * w1.T                # (Cr, C)
    b1_eff = bn2s * b1 + bn2b                     # (Cr,)
    w4t_eff = w4.T * bn3s[None, :]                # (C, Cr)
    b4_eff = w4.T @ bn3b + b4                     # (C,)

    wct = np.transpose(np.asarray(params["wc"]), (2, 0, 1)).reshape(Cr, K * Cr)
    w2t = np.transpose(np.asarray(params["w2"]), (2, 0, 1)).reshape(Cr, P * Cr)

    # ---- single C-row weight slab ----
    lay, total = _wslab_layout(C, Cr, K, P)
    wslab = np.zeros((C, total), np.float32)

    def put(name, mat):
        mat = np.asarray(mat, np.float32)
        if mat.ndim == 1:
            mat = mat[:, None]
        off, width = lay[name]
        wslab[:mat.shape[0], off:off + width] = mat

    put("w1t", w1t_eff)
    put("wq1t", np.asarray(params["wq1"]).T)
    put("w2t", w2t)
    put("w4t", w4t_eff)
    put("wq2t", np.asarray(params["wq2"]).T)
    put("bn1s", np.asarray(params["bn1_scale"]))
    put("bn1b", np.asarray(params["bn1_shift"]))
    put("b1", b1_eff)
    put("b4", b4_eff)
    put("bq1", np.asarray(params["bq1"]))
    put("bq2", np.asarray(params["bq2"]))

    # ---- stacked Volterra matrix: [wct ; pad ; sel_left ; pad ; sel_right] ----
    off_l = _rup8(Cr)
    off_r = off_l + _rup8(P * Cr)
    vw_rows = _rup8(off_r + P * Cr)
    vw = np.zeros((vw_rows, K * Cr), np.float32)
    vw[0:Cr, :] = wct
    pairs = [(a, b) for a in range(K) for b in range(a, K)]
    for p, (a, b) in enumerate(pairs):
        for c in range(Cr):
            vw[off_l + p * Cr + c, a * Cr + c] = 1.0
            vw[off_r + p * Cr + c, b * Cr + c] = 1.0

    return {"wslab": jnp.asarray(wslab), "vw": jnp.asarray(vw),
            "pool": jnp.asarray(pool), "gt": jnp.asarray(gt),
            "umat": jnp.asarray(umat)}


# --------------------------------------------------------------------------
# fused Pallas forward
# --------------------------------------------------------------------------
def _pick_block_b(N, max_b=8):
    cands = [b for b in range(1, min(N, max_b) + 1) if N % b == 0]
    two = [b for b in cands if N // b >= 2]     # keep >= 2 grid steps (v7x megacore)
    return max(two) if two else max(cands)


def hla_forward(x_nchw, packed, *, kernel_size, pooling_size, padding, block_b=None):
    N, C, H, W = x_nchw.shape
    p0, p1 = pooling_size
    assert H % p0 == 0 and W % p1 == 0, "in_size must be divisible by pooling_size"
    kh, kw = kernel_size
    K, S, HW = kh * kw, p0 * p1, H * W
    P = K * (K + 1) // 2
    wslab, vw, pool = packed["wslab"], packed["vw"], packed["pool"]
    gt, umat = packed["gt"], packed["umat"]
    Cr = vw.shape[1] // K
    lay, _ = _wslab_layout(C, Cr, K, P)
    off_l = _rup8(Cr)
    off_r = off_l + _rup8(P * Cr)

    B = block_b if block_b is not None else _pick_block_b(N)
    assert N % B == 0
    G = N // B
    BS = B * S

    # structural slab (depends on the batch block B, sample-independent weights):
    #   [ batched tap-shift (BS, K*BS) | upsample (S->HW padded to BS rows)
    #     | lane replication (B->BS padded to BS rows) ]
    eyeB = jnp.eye(B, dtype=f32)
    gtb = jnp.einsum("bc,xty->bxtcy", eyeB, gt.reshape(S, K, S)).reshape(BS, K * BS)
    um_pad = jnp.zeros((BS, HW), f32).at[0:S, :].set(umat)
    rep = jnp.kron(eyeB, jnp.ones((1, S), f32))              # (B, BS)
    rep_pad = jnp.zeros((BS, BS), f32).at[0:B, :].set(rep)
    smat = jnp.concatenate([gtb, um_pad, rep_pad], axis=1)   # (BS, K*BS + HW + BS)
    GTW = K * BS
    REP_OFF = GTW + HW

    def wseg(ref, name, rows):
        off, width = lay[name]
        return ref[0:rows, off:off + width]

    def kernel(x_ref, w_ref, vw_ref, pool_ref, smat_ref, o_ref, tv_ref):
        x3 = x_ref[...]                                           # (B, C, HW) raw input

        # ---- BN1 + ReLU + adaptive avg pool for the whole block (one MXU dot) ----
        bn1s = wseg(w_ref, "bn1s", C)[None]                       # (1, C, 1)
        bn1b = wseg(w_ref, "bn1b", C)[None]
        xr = jnp.maximum(x3 * bn1s + bn1b, 0.0)
        pooled = jnp.dot(xr.reshape(B * C, HW), pool_ref[...],
                         preferred_element_type=f32)              # (B*C, S)

        # batch -> lane axis for the reduced-channel stage (no-op when B == 1)
        if B > 1:
            pooled_t = jnp.concatenate(
                [pooled[b * C:(b + 1) * C, :] for b in range(B)], axis=1)   # (C, BS)
        else:
            pooled_t = pooled

        # ---- 1x1 conv C->Cr (+bias) with BN2 folded in ----
        h = jnp.dot(wseg(w_ref, "w1t", Cr), pooled_t,
                    preferred_element_type=f32) + wseg(w_ref, "b1", Cr)     # (Cr, BS)

        # ---- Volconv: all K shifted taps in one dot (tap-major lane blocks) ----
        taps_h = jnp.dot(h, smat_ref[:, 0:GTW], preferred_element_type=f32)  # (Cr, K*BS)
        # lane-blocks -> sublane stack via VMEM scratch (K static stores)
        for t in range(K):
            tv_ref[t * Cr:(t + 1) * Cr, :] = taps_h[:, t * BS:(t + 1) * BS]
        taps_v = tv_ref[...]                                       # (K*Cr, BS)

        # fused [1st-order weights ; pair-select L ; pair-select R] -> one MXU dot
        y = jnp.dot(vw_ref[...], taps_v, preferred_element_type=f32)
        vol = y[0:Cr] + jnp.dot(
            wseg(w_ref, "w2t", Cr),
            y[off_l:off_l + P * Cr] * y[off_r:off_r + P * Cr],
            preferred_element_type=f32)                            # (Cr, BS)

        # ---- ReLU + (BN3 folded) 1x1 conv Cr->C (+bias) + sigmoid ----
        x1 = jax.nn.sigmoid(
            jnp.dot(wseg(w_ref, "w4t", C), jnp.maximum(vol, 0.0),
                    preferred_element_type=f32) + wseg(w_ref, "b4", C))      # (C, BS)

        # ---- sq branch (on the raw input, as in the reference) ----
        gap = jnp.mean(x3.reshape(B * C, HW), axis=1, keepdims=True)         # (B*C, 1)
        if B > 1:
            gap_t = jnp.concatenate(
                [gap[b * C:(b + 1) * C, :] for b in range(B)], axis=1)       # (C, B)
        else:
            gap_t = gap
        hq = jnp.maximum(
            jnp.dot(wseg(w_ref, "wq1t", Cr), gap_t, preferred_element_type=f32)
            + wseg(w_ref, "bq1", Cr), 0.0)
        x2 = jax.nn.sigmoid(
            jnp.dot(wseg(w_ref, "wq2t", C), hq, preferred_element_type=f32)
            + wseg(w_ref, "bq2", C))                                          # (C, B)
        x3m = jnp.mean(x2, axis=0, keepdims=True)                             # (1, B)
        x2m = x3m - jnp.maximum(x3m - x2, 0.0)                                # min(x3m, x2)

        # broadcast x2m over each sample's S lanes via the replication matrix
        x2m_w = jnp.dot(x2m, smat_ref[0:B, REP_OFF:REP_OFF + BS],
                        preferred_element_type=f32)                            # (C, BS)
        att = x2m_w + x1 - x2m_w * x1                                          # (C, BS)

        # ---- back to batch-on-sublanes, nearest upsample, apply to raw input ----
        if B > 1:
            att_bt = jnp.concatenate(
                [att[:, b * S:(b + 1) * S] for b in range(B)], axis=0)         # (B*C, S)
        else:
            att_bt = att
        att_up = jnp.dot(att_bt, smat_ref[0:S, GTW:GTW + HW],
                         preferred_element_type=f32)                           # (B*C, HW)
        o_ref[...] = (x3.reshape(B * C, HW) * att_up).reshape(B, C, HW)

    def const_spec(arr):
        nd = arr.ndim
        return pl.BlockSpec(arr.shape, lambda n, _nd=nd: (0,) * _nd)

    x_flat = x_nchw.reshape(N, C, HW).astype(f32)

    flops_blk = (2 * B * C * HW * S + 2 * Cr * C * BS + 2 * Cr * BS * GTW
                 + 2 * vw.shape[0] * (K * Cr) * BS + 2 * Cr * (P * Cr) * BS
                 + 2 * C * Cr * BS + 2 * B * C * S * HW + 8 * B * C * HW)
    cost = pl.CostEstimate(
        flops=int(flops_blk * G),
        transcendentals=int((C * BS + C * B) * G),
        bytes_accessed=int(8 * N * C * HW
                           + 4 * (wslab.size + vw.size + pool.size + smat.size)))

    out = pl.pallas_call(
        kernel,
        grid=(G,),
        in_specs=[pl.BlockSpec((B, C, HW), lambda n: (n, 0, 0)),
                  const_spec(wslab), const_spec(vw), const_spec(pool),
                  const_spec(smat)],
        out_specs=pl.BlockSpec((B, C, HW), lambda n: (n, 0, 0)),
        out_shape=jax.ShapeDtypeStruct((N, C, HW), f32),
        scratch_shapes=[pltpu.VMEM((K * Cr, BS), f32)],
        compiler_params=pltpu.CompilerParams(dimension_semantics=("parallel",)),
        cost_estimate=cost,
    )(x_flat, wslab, vw, pool, smat)
    return out.reshape(N, C, H, W)


# --------------------------------------------------------------------------
# pure-JAX reference (same semantics) for a correctness gate
# --------------------------------------------------------------------------
def hla_reference(x_nchw, params, *, kernel_size, pooling_size, padding):
    N, C, H, W = x_nchw.shape
    p0, p1 = pooling_size
    s0, s1 = H // p0, W // p1
    kh, kw = kernel_size
    ph, pw = padding
    K = kh * kw
    pairs = [(a, b) for a in range(K) for b in range(a, K)]
    hi = "highest"
    bc = lambda v: v[None, :, None, None]

    x = x_nchw.astype(jnp.float32)
    xr = jnp.maximum(x * bc(params["bn1_scale"]) + bc(params["bn1_shift"]), 0.0)
    pooled = xr.reshape(N, C, p0, s0, p1, s1).mean(axis=(3, 5))
    h = jnp.einsum("ncij,cd->ndij", pooled, params["w1"], precision=hi) + bc(params["b1"])
    h = h * bc(params["bn2_scale"]) + bc(params["bn2_shift"])
    hp = jnp.pad(h, ((0, 0), (0, 0), (ph, ph), (pw, pw)))
    taps = [hp[:, :, dy:dy + p0, dx:dx + p1] for dy in range(kh) for dx in range(kw)]
    vol = sum(jnp.einsum("ncij,cd->ndij", taps[t], params["wc"][t], precision=hi)
              for t in range(K))
    vol = vol + sum(jnp.einsum("ncij,cd->ndij", taps[a] * taps[b], params["w2"][p], precision=hi)
                    for p, (a, b) in enumerate(pairs))
    r = jnp.maximum(vol, 0.0)
    r = r * bc(params["bn3_scale"]) + bc(params["bn3_shift"])
    x1 = jax.nn.sigmoid(jnp.einsum("ncij,cd->ndij", r, params["w4"], precision=hi) + bc(params["b4"]))
    gap = x.mean(axis=(2, 3))
    hq = jnp.maximum(jnp.einsum("nc,cd->nd", gap, params["wq1"], precision=hi) + params["bq1"][None, :], 0.0)
    x2 = jax.nn.sigmoid(jnp.einsum("nc,cd->nd", hq, params["wq2"], precision=hi) + params["bq2"][None, :])
    x3 = x2.mean(axis=1, keepdims=True)
    x2m = x3 - jnp.maximum(x3 - x2, 0.0)
    att = x2m[:, :, None, None] + x1 - x2m[:, :, None, None] * x1
    att_up = jnp.repeat(jnp.repeat(att, s0, axis=2), s1, axis=3)
    return x * att_up


# --------------------------------------------------------------------------
if __name__ == "__main__":
    # HLA(in_chan=16, kernel_size=(3,3), pooling_size=(4,4), padding=(1,1),
    #     in_size=(16,16), reduce=4); batch 4 so the batched (B=2) path is used.
    N, C, H, W = 4, 16, 16, 16
    reduce_ = 4
    Cr = C // reduce_
    kernel_size = (3, 3)
    pooling_size = (4, 4)
    padding = (1, 1)
    K = kernel_size[0] * kernel_size[1]
    P = K * (K + 1) // 2

    key = jax.random.PRNGKey(0)
    kx, kp = jax.random.split(key)
    x = jax.random.normal(kx, (N, C, H, W), f32)
    params = init_params(kp, C, Cr, K, P)
    packed = pack_hla(params, in_size=(H, W), kernel_size=kernel_size,
                      pooling_size=pooling_size, padding=padding)

    out = hla_forward(x, packed, kernel_size=kernel_size,
                      pooling_size=pooling_size, padding=padding)
    out = jax.block_until_ready(out)
    assert out.shape == (N, C, H, W)
    assert bool(jnp.all(jnp.isfinite(out)))

    ref = hla_reference(x, params, kernel_size=kernel_size,
                        pooling_size=pooling_size, padding=padding)
    err = float(jnp.max(jnp.abs(out - ref)))
    assert err < 1e-2, f"mismatch vs pure-JAX reference: {err}"
    print("KERNEL_OK")
</pallas_src>

<mosaic_0001>
module attributes {stable_mosaic.version = 11 : i64} {
  func.func @kernel(%arg0: i32, %arg1: memref<2x16x256xf32, #tpu.memory_space<vmem>>, %arg2: memref<16x226xf32, #tpu.memory_space<vmem>>, %arg3: memref<376x36xf32, #tpu.memory_space<vmem>>, %arg4: memref<256x16xf32, #tpu.memory_space<vmem>>, %arg5: memref<32x576xf32, #tpu.memory_space<vmem>>, %arg6: memref<2x16x256xf32, #tpu.memory_space<vmem>>, %arg7: memref<36x32xf32, #tpu.memory_space<vmem>>) attributes {dimension_semantics = [#tpu.dimension_semantics<parallel>], iteration_bounds = array<i64: 2>, scalar_prefetch = 0 : i64, scratch_operands = 1 : i64, tpu.core_type = #tpu.core_type<tc>, window_params = [{transform_indices = @transform_0, window_bounds = array<i64: 2, 16, 256>}, {pipeline_mode = #tpu.pipeline_mode<synchronous>, transform_indices = @transform_1, window_bounds = array<i64: 16, 226>}, {pipeline_mode = #tpu.pipeline_mode<synchronous>, transform_indices = @transform_2, window_bounds = array<i64: 376, 36>}, {pipeline_mode = #tpu.pipeline_mode<synchronous>, transform_indices = @transform_3, window_bounds = array<i64: 256, 16>}, {pipeline_mode = #tpu.pipeline_mode<synchronous>, transform_indices = @transform_4, window_bounds = array<i64: 32, 576>}, {transform_indices = @transform_5, window_bounds = array<i64: 2, 16, 256>}]} {
    %c0 = arith.constant 0 : index
    %c0_0 = arith.constant 0 : index
    %c0_1 = arith.constant 0 : index
    %0 = vector.load %arg1[%c0, %c0_0, %c0_1] : memref<2x16x256xf32, #tpu.memory_space<vmem>>, vector<2x16x256xf32>
    %c0_2 = arith.constant 0 : index
    %c220 = arith.constant 220 : index
    %1 = vector.load %arg2[%c0_2, %c220] : memref<16x226xf32, #tpu.memory_space<vmem>>, vector<16x1xf32>
    %2 = vector.shape_cast %1 : vector<16x1xf32> to vector<1x16x1xf32>
    %c0_3 = arith.constant 0 : index
    %c221 = arith.constant 221 : index
    %3 = vector.load %arg2[%c0_3, %c221] : memref<16x226xf32, #tpu.memory_space<vmem>>, vector<16x1xf32>
    %4 = vector.shape_cast %3 : vector<16x1xf32> to vector<1x16x1xf32>
    %5 = vector.broadcast %2 : vector<1x16x1xf32> to vector<2x16x256xf32>
    %6 = arith.mulf %0, %5 : vector<2x16x256xf32>
    %7 = vector.broadcast %4 : vector<1x16x1xf32> to vector<2x16x256xf32>
    %8 = arith.addf %6, %7 : vector<2x16x256xf32>
    %cst = arith.constant 0.000000e+00 : f32
    %9 = vector.broadcast %cst : f32 to vector<2x16x256xf32>
    %10 = arith.maximumf %8, %9 : vector<2x16x256xf32>
    %11 = vector.shape_cast %10 : vector<2x16x256xf32> to vector<32x256xf32>
    %c0_4 = arith.constant 0 : index
    %c0_5 = arith.constant 0 : index
    %12 = vector.load %arg4[%c0_4, %c0_5] : memref<256x16xf32, #tpu.memory_space<vmem>>, vector<256x16xf32>
    %cst_6 = arith.constant dense<0.000000e+00> : vector<32x16xf32>
    %13 = tpu.matmul %11, %12, %cst_6 {dimension_numbers = #tpu.dot_dimension_numbers<[1], [0], [0], [1], [0, 0, 1, 1], [], []>} : vector<32x256xf32>, vector<256x16xf32>, vector<32x16xf32> -> vector<32x16xf32>
    %14 = vector.extract_strided_slice %13 {offsets = [0, 0], sizes = [16, 16], strides = [1, 1]} : vector<32x16xf32> to vector<16x16xf32>
    %15 = vector.extract_strided_slice %13 {offsets = [16, 0], sizes = [16, 16], strides = [1, 1]} : vector<32x16xf32> to vector<16x16xf32>
    %16 = tpu.concatenate %14, %15 in 1 : vector<16x16xf32>, vector<16x16xf32> -> vector<16x32xf32>
    %c0_7 = arith.constant 0 : index
    %c0_8 = arith.constant 0 : index
    %17 = vector.load %arg2[%c0_7, %c0_8] : memref<16x226xf32, #tpu.memory_space<vmem>>, vector<4x16xf32>
    %cst_9 = arith.constant dense<0.000000e+00> : vector<4x32xf32>
    %18 = tpu.matmul %17, %16, %cst_9 {dimension_numbers = #tpu.dot_dimension_numbers<[1], [0], [0], [1], [0, 0, 1, 1], [], []>} : vector<4x16xf32>, vector<16x32xf32>, vector<4x32xf32> -> vector<4x32xf32>
    %c0_10 = arith.constant 0 : index
    %c222 = arith.constant 222 : index
    %19 = vector.load %arg2[%c0_10, %c222] : memref<16x226xf32, #tpu.memory_space<vmem>>, vector<4x1xf32>
    %20 = vector.broadcast %19 : vector<4x1xf32> to vector<4x32xf32>
    %21 = arith.addf %18, %20 : vector<4x32xf32>
    %c0_11 = arith.constant 0 : index
    %c0_12 = arith.constant 0 : index
    %22 = vector.load %arg5[%c0_11, %c0_12] : memref<32x576xf32, #tpu.memory_space<vmem>>, vector<32x288xf32>
    %cst_13 = arith.constant dense<0.000000e+00> : vector<4x288xf32>
    %23 = tpu.matmul %21, %22, %cst_13 {dimension_numbers = #tpu.dot_dimension_numbers<[1], [0], [0], [1], [0, 0, 1, 1], [], []>} : vector<4x32xf32>, vector<32x288xf32>, vector<4x288xf32> -> vector<4x288xf32>
    %24 = vector.extract_strided_slice %23 {offsets = [0, 0], sizes = [4, 32], strides = [1, 1]} : vector<4x288xf32> to vector<4x32xf32>
    %c0_14 = arith.constant 0 : index
    %c0_15 = arith.constant 0 : index
    %25 = vector.load %arg7[%c0_14, %c0_15] : memref<36x32xf32, #tpu.memory_space<vmem>>, vector<4x32xf32>
    tpu.vector_store %arg7[%c0_14, %c0_15], %24 {strides = array<i32>} : memref<36x32xf32, #tpu.memory_space<vmem>>, vector<4x32xf32>,
    %26 = vector.extract_strided_slice %23 {offsets = [0, 32], sizes = [4, 32], strides = [1, 1]} : vector<4x288xf32> to vector<4x32xf32>
    %c4 = arith.constant 4 : index
    %c0_16 = arith.constant 0 : index
    %27 = vector.load %arg7[%c4, %c0_16] : memref<36x32xf32, #tpu.memory_space<vmem>>, vector<4x32xf32>
    tpu.vector_store %arg7[%c4, %c0_16], %26 {strides = array<i32>} : memref<36x32xf32, #tpu.memory_space<vmem>>, vector<4x32xf32>,
    %28 = vector.extract_strided_slice %23 {offsets = [0, 64], sizes = [4, 32], strides = [1, 1]} : vector<4x288xf32> to vector<4x32xf32>
    %c8 = arith.constant 8 : index
    %c0_17 = arith.constant 0 : index
    %29 = vector.load %arg7[%c8, %c0_17] : memref<36x32xf32, #tpu.memory_space<vmem>>, vector<4x32xf32>
    tpu.vector_store %arg7[%c8, %c0_17], %28 {strides = array<i32>} : memref<36x32xf32, #tpu.memory_space<vmem>>, vector<4x32xf32>,
    %30 = vector.extract_strided_slice %23 {offsets = [0, 96], sizes = [4, 32], strides = [1, 1]} : vector<4x288xf32> to vector<4x32xf32>
    %c12 = arith.constant 12 : index
    %c0_18 = arith.constant 0 : index
    %31 = vector.load %arg7[%c12, %c0_18] : memref<36x32xf32, #tpu.memory_space<vmem>>, vector<4x32xf32>
    tpu.vector_store %arg7[%c12, %c0_18], %30 {strides = array<i32>} : memref<36x32xf32, #tpu.memory_space<vmem>>, vector<4x32xf32>,
    %32 = vector.extract_strided_slice %23 {offsets = [0, 128], sizes = [4, 32], strides = [1, 1]} : vector<4x288xf32> to vector<4x32xf32>
    %c16 = arith.constant 16 : index
    %c0_19 = arith.constant 0 : index
    %33 = vector.load %arg7[%c16, %c0_19] : memref<36x32xf32, #tpu.memory_space<vmem>>, vector<4x32xf32>
    tpu.vector_store %arg7[%c16, %c0_19], %32 {strides = array<i32>} : memref<36x32xf32, #tpu.memory_space<vmem>>, vector<4x32xf32>,
    %34 = vector.extract_strided_slice %23 {offsets = [0, 160], sizes = [4, 32], strides = [1, 1]} : vector<4x288xf32> to vector<4x32xf32>
    %c20 = arith.constant 20 : index
    %c0_20 = arith.constant 0 : index
    %35 = vector.load %arg7[%c20, %c0_20] : memref<36x32xf32, #tpu.memory_space<vmem>>, vector<4x32xf32>
    tpu.vector_store %arg7[%c20, %c0_20], %34 {strides = array<i32>} : memref<36x32xf32, #tpu.memory_space<vmem>>, vector<4x32xf32>,
    %36 = vector.extract_strided_slice %23 {offsets = [0, 192], sizes = [4, 32], strides = [1, 1]} : vector<4x288xf32> to vector<4x32xf32>
    %c24 = arith.constant 24 : index
    %c0_21 = arith.constant 0 : index
    %37 = vector.load %arg7[%c24, %c0_21] : memref<36x32xf32, #tpu.memory_space<vmem>>, vector<4x32xf32>
    tpu.vector_store %arg7[%c24, %c0_21], %36 {strides = array<i32>} : memref<36x32xf32, #tpu.memory_space<vmem>>, vector<4x32xf32>,
    %38 = vector.extract_strided_slice %23 {offsets = [0, 224], sizes = [4, 32], strides = [1, 1]} : vector<4x288xf32> to vector<4x32xf32>
    %c28 = arith.constant 28 : index
    %c0_22 = arith.constant 0 : index
    %39 = vector.load %arg7[%c28, %c0_22] : memref<36x32xf32, #tpu.memory_space<vmem>>, vector<4x32xf32>
    tpu.vector_store %arg7[%c28, %c0_22], %38 {strides = array<i32>} : memref<36x32xf32, #tpu.memory_space<vmem>>, vector<4x32xf32>,
    %40 = vector.extract_strided_slice %23 {offsets = [0, 256], sizes = [4, 32], strides = [1, 1]} : vector<4x288xf32> to vector<4x32xf32>
    %c32 = arith.constant 32 : index
    %c0_23 = arith.constant 0 : index
    %41 = vector.load %arg7[%c32, %c0_23] : memref<36x32xf32, #tpu.memory_space<vmem>>, vector<4x32xf32>
    tpu.vector_store %arg7[%c32, %c0_23], %40 {strides = array<i32>} : memref<36x32xf32, #tpu.memory_space<vmem>>, vector<4x32xf32>,
    %c0_24 = arith.constant 0 : index
    %c0_25 = arith.constant 0 : index
    %42 = vector.load %arg7[%c0_24, %c0_25] : memref<36x32xf32, #tpu.memory_space<vmem>>, vector<36x32xf32>
    %c0_26 = arith.constant 0 : index
    %c0_27 = arith.constant 0 : index
    %43 = vector.load %arg3[%c0_26, %c0_27] : memref<376x36xf32, #tpu.memory_space<vmem>>, vector<376x36xf32>
    %cst_28 = arith.constant dense<0.000000e+00> : vector<376x32xf32>
    %44 = tpu.matmul %43, %42, %cst_28 {dimension_numbers = #tpu.dot_dimension_numbers<[1], [0], [0], [1], [0, 0, 1, 1], [], []>} : vector<376x36xf32>, vector<36x32xf32>, vector<376x32xf32> -> vector<376x32xf32>
    %45 = vector.extract_strided_slice %44 {offsets = [0, 0], sizes = [4, 32], strides = [1, 1]} : vector<376x32xf32> to vector<4x32xf32>
    %c0_29 = arith.constant 0 : index
    %c32_30 = arith.constant 32 : index
    %46 = vector.load %arg2[%c0_29, %c32_30] : memref<16x226xf32, #tpu.memory_space<vmem>>, vector<4x180xf32>
    %47 = vector.extract_strided_slice %44 {offsets = [8, 0], sizes = [180, 32], strides = [1, 1]} : vector<376x32xf32> to vector<180x32xf32>
    %48 = vector.extract_strided_slice %44 {offsets = [192, 0], sizes = [180, 32], strides = [1, 1]} : vector<376x32xf32> to vector<180x32xf32>
    %49 = arith.mulf %47, %48 : vector<180x32xf32>
    %cst_31 = arith.constant dense<0.000000e+00> : vector<4x32xf32>
    %50 = tpu.matmul %46, %49, %cst_31 {dimension_numbers = #tpu.dot_dimension_numbers<[1], [0], [0], [1], [0, 0, 1, 1], [], []>} : vector<4x180xf32>, vector<180x32xf32>, vector<4x32xf32> -> vector<4x32xf32>
    %51 = arith.addf %45, %50 : vector<4x32xf32>
    %c0_32 = arith.constant 0 : index
    %c212 = arith.constant 212 : index
    %52 = vector.load %arg2[%c0_32, %c212] : memref<16x226xf32, #tpu.memory_space<vmem>>, vector<16x4xf32>
    %cst_33 = arith.constant 0.000000e+00 : f32
    %53 = vector.broadcast %cst_33 : f32 to vector<4x32xf32>
    %54 = arith.maximumf %51, %53 : vector<4x32xf32>
    %cst_34 = arith.constant dense<0.000000e+00> : vector<16x32xf32>
    %55 = tpu.matmul %52, %54, %cst_34 {dimension_numbers = #tpu.dot_dimension_numbers<[1], [0], [0], [1], [0, 0, 1, 1], [], []>} : vector<16x4xf32>, vector<4x32xf32>, vector<16x32xf32> -> vector<16x32xf32>
    %c0_35 = arith.constant 0 : index
    %c223 = arith.constant 223 : index
    %56 = vector.load %arg2[%c0_35, %c223] : memref<16x226xf32, #tpu.memory_space<vmem>>, vector<16x1xf32>
    %57 = vector.broadcast %56 : vector<16x1xf32> to vector<16x32xf32>
    %58 = arith.addf %55, %57 : vector<16x32xf32>
    %59 = arith.negf %58 : vector<16x32xf32>
    %60 = math.exp %59 : vector<16x32xf32>
    %cst_36 = arith.constant 1.000000e+00 : f32
    %61 = vector.broadcast %cst_36 : f32 to vector<16x32xf32>
    %62 = arith.addf %61, %60 : vector<16x32xf32>
    %63 = arith.divf %61, %62 : vector<16x32xf32>
    %64 = vector.shape_cast %0 : vector<2x16x256xf32> to vector<32x256xf32>
    %cst_37 = arith.constant dense<0.000000e+00> : vector<32xf32>
    %65 = vector.multi_reduction <add>, %64, %cst_37 [1] : vector<32x256xf32> to vector<32xf32>
    %66 = vector.shape_cast %65 : vector<32xf32> to vector<32x1xf32>
    %cst_38 = arith.constant 2.560000e+02 : f32
    %67 = vector.broadcast %cst_38 : f32 to vector<32x1xf32>
    %68 = arith.divf %66, %67 : vector<32x1xf32>
    %69 = vector.extract_strided_slice %68 {offsets = [0, 0], sizes = [16, 1], strides = [1, 1]} : vector<32x1xf32> to vector<16x1xf32>
    %70 = vector.extract_strided_slice %68 {offsets = [16, 0], sizes = [16, 1], strides = [1, 1]} : vector<32x1xf32> to vector<16x1xf32>
    %71 = tpu.concatenate %69, %70 in 1 : vector<16x1xf32>, vector<16x1xf32> -> vector<16x2xf32>
    %c0_39 = arith.constant 0 : index
    %c16_40 = arith.constant 16 : index
    %72 = vector.load %arg2[%c0_39, %c16_40] : memref<16x226xf32, #tpu.memory_space<vmem>>, vector<4x16xf32>
    %cst_41 = arith.constant dense<0.000000e+00> : vector<4x2xf32>
    %73 = tpu.matmul %72, %71, %cst_41 {dimension_numbers = #tpu.dot_dimension_numbers<[1], [0], [0], [1], [0, 0, 1, 1], [], []>} : vector<4x16xf32>, vector<16x2xf32>, vector<4x2xf32> -> vector<4x2xf32>
    %c0_42 = arith.constant 0 : index
    %c224 = arith.constant 224 : index
    %74 = vector.load %arg2[%c0_42, %c224] : memref<16x226xf32, #tpu.memory_space<vmem>>, vector<4x1xf32>
    %75 = vector.broadcast %74 : vector<4x1xf32> to vector<4x2xf32>
    %76 = arith.addf %73, %75 : vector<4x2xf32>
    %cst_43 = arith.constant 0.000000e+00 : f32
    %77 = vector.broadcast %cst_43 : f32 to vector<4x2xf32>
    %78 = arith.maximumf %76, %77 : vector<4x2xf32>
    %c0_44 = arith.constant 0 : index
    %c216 = arith.constant 216 : index
    %79 = vector.load %arg2[%c0_44, %c216] : memref<16x226xf32, #tpu.memory_space<vmem>>, vector<16x4xf32>
    %cst_45 = arith.constant dense<0.000000e+00> : vector<16x2xf32>
    %80 = tpu.matmul %79, %78, %cst_45 {dimension_numbers = #tpu.dot_dimension_numbers<[1], [0], [0], [1], [0, 0, 1, 1], [], []>} : vector<16x4xf32>, vector<4x2xf32>, vector<16x2xf32> -> vector<16x2xf32>
    %c0_46 = arith.constant 0 : index
    %c225 = arith.constant 225 : index
    %81 = vector.load %arg2[%c0_46, %c225] : memref<16x226xf32, #tpu.memory_space<vmem>>, vector<16x1xf32>
    %82 = vector.broadcast %81 : vector<16x1xf32> to vector<16x2xf32>
    %83 = arith.addf %80, %82 : vector<16x2xf32>
    %84 = arith.negf %83 : vector<16x2xf32>
    %85 = math.exp %84 : vector<16x2xf32>
    %cst_47 = arith.constant 1.000000e+00 : f32
    %86 = vector.broadcast %cst_47 : f32 to vector<16x2xf32>
    %87 = arith.addf %86, %85 : vector<16x2xf32>
    %88 = arith.divf %86, %87 : vector<16x2xf32>
    %cst_48 = arith.constant dense<0.000000e+00> : vector<2xf32>
    %89 = vector.multi_reduction <add>, %88, %cst_48 [0] : vector<16x2xf32> to vector<2xf32>
    %90 = vector.shape_cast %89 : vector<2xf32> to vector<1x2xf32>
    %cst_49 = arith.constant 1.600000e+01 : f32
    %91 = vector.broadcast %cst_49 : f32 to vector<1x2xf32>
    %92 = arith.divf %90, %91 : vector<1x2xf32>
    %93 = vector.broadcast %92 : vector<1x2xf32> to vector<16x2xf32>
    %94 = arith.subf %93, %88 : vector<16x2xf32>
    %cst_50 = arith.constant 0.000000e+00 : f32
    %95 = vector.broadcast %cst_50 : f32 to vector<16x2xf32>
    %96 = arith.maximumf %94, %95 : vector<16x2xf32>
    %97 = vector.broadcast %92 : vector<1x2xf32> to vector<16x2xf32>
    %98 = arith.subf %97, %96 : vector<16x2xf32>
    %c0_51 = arith.constant 0 : index
    %c544 = arith.constant 544 : index
    %99 = vector.load %arg5[%c0_51, %c544] : memref<32x576xf32, #tpu.memory_space<vmem>>, vector<2x32xf32>
    %cst_52 = arith.constant dense<0.000000e+00> : vector<16x32xf32>
    %100 = tpu.matmul %98, %99, %cst_52 {dimension_numbers = #tpu.dot_dimension_numbers<[1], [0], [0], [1], [0, 0, 1, 1], [], []>} : vector<16x2xf32>, vector<2x32xf32>, vector<16x32xf32> -> vector<16x32xf32>
    %101 = arith.addf %100, %63 : vector<16x32xf32>
    %102 = arith.mulf %100, %63 : vector<16x32xf32>
    %103 = arith.subf %101, %102 : vector<16x32xf32>
    %104 = vector.extract_strided_slice %103 {offsets = [0, 0], sizes = [16, 16], strides = [1, 1]} : vector<16x32xf32> to vector<16x16xf32>
    %105 = vector.extract_strided_slice %103 {offsets = [0, 16], sizes = [16, 16], strides = [1, 1]} : vector<16x32xf32> to vector<16x16xf32>
    %106 = tpu.concatenate %104, %105 in 0 : vector<16x16xf32>, vector<16x16xf32> -> vector<32x16xf32>
    %c0_53 = arith.constant 0 : index
    %c288 = arith.constant 288 : index
    %107 = vector.load %arg5[%c0_53, %c288] : memref<32x576xf32, #tpu.memory_space<vmem>>, vector<16x256xf32>
    %cst_54 = arith.constant dense<0.000000e+00> : vector<32x256xf32>
    %108 = tpu.matmul %106, %107, %cst_54 {dimension_numbers = #tpu.dot_dimension_numbers<[1], [0], [0], [1], [0, 0, 1, 1], [], []>} : vector<32x16xf32>, vector<16x256xf32>, vector<32x256xf32> -> vector<32x256xf32>
    %109 = vector.shape_cast %0 : vector<2x16x256xf32> to vector<32x256xf32>
    %110 = arith.mulf %109, %108 : vector<32x256xf32>
    %111 = vector.shape_cast %110 : vector<32x256xf32> to vector<2x16x256xf32>
    %c0_55 = arith.constant 0 : index
    %c0_56 = arith.constant 0 : index
    %c0_57 = arith.constant 0 : index
    %112 = vector.load %arg6[%c0_55, %c0_56, %c0_57] : memref<2x16x256xf32, #tpu.memory_space<vmem>>, vector<2x16x256xf32>
    tpu.vector_store %arg6[%c0_55, %c0_56, %c0_57], %111 {strides = array<i32>} : memref<2x16x256xf32, #tpu.memory_space<vmem>>, vector<2x16x256xf32>,
    return
  }
  func.func @transform_0(%arg0: i32) -> (i32, i32, i32) {
    %c0_i32 = arith.constant 0 : i32
    %c0_i32_0 = arith.constant 0 : i32
    %c0_i32_1 = arith.constant 0 : i32
    return %arg0, %c0_i32, %c0_i32_0 : i32, i32, i32
  }
  func.func @transform_1(%arg0: i32) -> (i32, i32) {
    %c0_i32 = arith.constant 0 : i32
    %c0_i32_0 = arith.constant 0 : i32
    %c0_i32_1 = arith.constant 0 : i32
    return %c0_i32, %c0_i32_0 : i32, i32
  }
  func.func @transform_2(%arg0: i32) -> (i32, i32) {
    %c0_i32 = arith.constant 0 : i32
    %c0_i32_0 = arith.constant 0 : i32
    %c0_i32_1 = arith.constant 0 : i32
    return %c0_i32, %c0_i32_0 : i32, i32
  }
  func.func @transform_3(%arg0: i32) -> (i32, i32) {
    %c0_i32 = arith.constant 0 : i32
    %c0_i32_0 = arith.constant 0 : i32
    %c0_i32_1 = arith.constant 0 : i32
    return %c0_i32, %c0_i32_0 : i32, i32
  }
  func.func @transform_4(%arg0: i32) -> (i32, i32) {
    %c0_i32 = arith.constant 0 : i32
    %c0_i32_0 = arith.constant 0 : i32
    %c0_i32_1 = arith.constant 0 : i32
    return %c0_i32, %c0_i32_0 : i32, i32
  }
  func.func @transform_5(%arg0: i32) -> (i32, i32, i32) {
    %c0_i32 = arith.constant 0 : i32
    %c0_i32_0 = arith.constant 0 : i32
    %c0_i32_1 = arith.constant 0 : i32
    return %arg0, %c0_i32, %c0_i32_0 : i32, i32, i32
  }
}

</mosaic_0001>

<llo_original>
// kernel: tpu_custom_call.1
$region0: #{tpu_custom_call.1}
  #allocation0 [shape = 'u32[]', space=smem, size = 0x4, offset = 0x4, fixed_abs, tag = 'smem constant byte address 0x4 - core index']
  #allocation1 [shape = 'u32[144,128]{1,0:T(1,128)}', space=vmem, size = 0x12000, scoped, tag = 'internal scratch']
  #allocation2 [shape = 'f32[36,32]{1,0:T(8,128)}', space=vmem, size = 0x5000, scoped, tag = 'scratch operand']
  %s0 = inlined_call_operand.vmem [shape: f32[4,16,256], index: 0, kind: input, shape index: {}]
  %s1 = inlined_call_operand.vmem [shape: f32[16,226], index: 1, kind: input, shape index: {}]
  %s2 = inlined_call_operand.vmem [shape: f32[376,36], index: 2, kind: input, shape index: {}]
  %s3 = inlined_call_operand.vmem [shape: f32[256,16], index: 3, kind: input, shape index: {}]
  %s4 = inlined_call_operand.vmem [shape: f32[32,576], index: 4, kind: input, shape index: {}]
  %s5 = inlined_call_operand.hbm [shape: f32[4,16,256], index: 5, kind: output, shape index: {}]
  %s6 = sld [smem:[#allocation0]]
  $region53: #{tpu_custom_call.1} parent=0
    _
  %s8 = ssub.s32 1, %s6
  %s9 = scalar_select 0, %s8, %s6
  $region1: #{tpu_custom_call.1} parent=0
    #allocation3 [shape = 'u8[65536]{0}', space=vmem, size = 0x10000, scoped, tag = 'output window, operand 0']
    #allocation4 [shape = 's32[2]{0}', space=sflag, size = 0x8, scoped, tag = 'scoped memory for tpu_custom_call.1']
    %10 = vsyncpa [#allocation4], 0
    %s11 = scalar_lea.sflag [#allocation4], 1
    %12 = vsyncpa %s11, 0
    loop: start=0, step=1, limit=4
    $region2: #{tpu_custom_call.1} parent=1 // loop_pre_header
      _
    $region3: #{tpu_custom_call.1} parent=1 // loop_header
      %s14 = sphi 0, %s18
      %p15 = scmp.ge.s32.totalorder %s14, 4
      %s24 = sphi 0, %s26
      %s27 = sphi 0, %s24
      %s28 = sphi 0, %s27
      %s44 = sphi 0, %s28
      %s48 = sphi 0, %s48
      %s50 = sphi 0, %s48
      %s51 = sphi 0, %s50
      %s65 = sphi 0, %s51
      %s69 = sphi 0, %s69
      %s71 = sphi 0, %s69
      %s72 = sphi 0, %s71
      %s86 = sphi 0, %s72
      %s90 = sphi 0, %s90
      %s92 = sphi 0, %s90
      %s93 = sphi 0, %s92
      %s107 = sphi 0, %s93
      %s111 = sphi 0, %s111
      %s113 = sphi 0, %s111
      %s114 = sphi 0, %s113
      %s128 = sphi 0, %s114
      %s134 = sphi 0, %s136
      %s137 = sphi 0, %s134
      %s138 = sphi 0, %s137
      %s154 = sphi 0, %s138
    $region4: #{tpu_custom_call.1} parent=1 // loop_header_branch
      %17 = sbr.rel (%p15) target = $region8
    $region5: #{tpu_custom_call.1} parent=1 // loop_body
      %s19 = ssub.s32 %s14, 1
      %s20 = ssub.s32 %s14, 2
      %s21 = sadd.s32 %s14, 1
      %s22 = ssub.s32 %s14, %s21
      %p23 = scmp.eq.s32.totalorder %s22, 0
      %s25 = sadd.s32 %s24, 1
      %s26 = scalar_select %p23, %s24, %s25
      %p29 = pneg %p23
      %p30 = scmp.eq.s32.totalorder %s14, 1
      %p31 = por %p29, %p30
      %p32 = scmp.ne.s32.totalorder %s24, %s27
      %p33 = scmp.eq.s32.totalorder %s14, 0
      %p34 = por %p32, %p33
      %p35 = scmp.ne.s32.totalorder %s24, %s27
      %p36 = scmp.eq.s32.totalorder %s19, 1
      %p37 = por %p35, %p36
      %p38 = scmp.ne.s32.totalorder %s27, %s28
      %p39 = scmp.eq.s32.totalorder %s19, 0
      %p40 = por %p38, %p39
      %p41 = scmp.ne.s32.totalorder %s27, %s28
      %p42 = scmp.eq.s32.totalorder %s20, 1
      %p43 = por %p41, %p42
      %p45 = scmp.ne.s32.totalorder %s28, %s44
      %p46 = scmp.eq.s32.totalorder %s20, 0
      %p47 = por %p45, %p46
      %s49 = sadd.s32 %s48, 1
      %p52 = scmp.eq.s32.totalorder %s14, 1
      %p53 = scmp.ne.s32.totalorder %s48, %s50
      %p54 = scmp.eq.s32.totalorder %s14, 0
      %p55 = por %p53, %p54
      %p56 = scmp.ne.s32.totalorder %s48, %s50
      %p57 = scmp.eq.s32.totalorder %s19, 1
      %p58 = por %p56, %p57
      %p59 = scmp.ne.s32.totalorder %s50, %s51
      %p60 = scmp.eq.s32.totalorder %s19, 0
      %p61 = por %p59, %p60
      %p62 = scmp.ne.s32.totalorder %s50, %s51
      %p63 = scmp.eq.s32.totalorder %s20, 1
      %p64 = por %p62, %p63
      %p66 = scmp.ne.s32.totalorder %s51, %s65
      %p67 = scmp.eq.s32.totalorder %s20, 0
      %p68 = por %p66, %p67
      %s70 = sadd.s32 %s69, 1
      %p73 = scmp.eq.s32.totalorder %s14, 1
      %p74 = scmp.ne.s32.totalorder %s69, %s71
      %p75 = scmp.eq.s32.totalorder %s14, 0
      %p76 = por %p74, %p75
      %p77 = scmp.ne.s32.totalorder %s69, %s71
      %p78 = scmp.eq.s32.totalorder %s19, 1
      %p79 = por %p77, %p78
      %p80 = scmp.ne.s32.totalorder %s71, %s72
      %p81 = scmp.eq.s32.totalorder %s19, 0
      %p82 = por %p80, %p81
      %p83 = scmp.ne.s32.totalorder %s71, %s72
      %p84 = scmp.eq.s32.totalorder %s20, 1
      %p85 = por %p83, %p84
      %p87 = scmp.ne.s32.totalorder %s72, %s86
      %p88 = scmp.eq.s32.totalorder %s20, 0
      %p89 = por %p87, %p88
      %s91 = sadd.s32 %s90, 1
      %p94 = scmp.eq.s32.totalorder %s14, 1
      %p95 = scmp.ne.s32.totalorder %s90, %s92
      %p96 = scmp.eq.s32.totalorder %s14, 0
      %p97 = por %p95, %p96
      %p98 = scmp.ne.s32.totalorder %s90, %s92
      %p99 = scmp.eq.s32.totalorder %s19, 1
      %p100 = por %p98, %p99
      %p101 = scmp.ne.s32.totalorder %s92, %s93
      %p102 = scmp.eq.s32.totalorder %s19, 0
      %p103 = por %p101, %p102
      %p104 = scmp.ne.s32.totalorder %s92, %s93
      %p105 = scmp.eq.s32.totalorder %s20, 1
      %p106 = por %p104, %p105
      %p108 = scmp.ne.s32.totalorder %s93, %s107
      %p109 = scmp.eq.s32.totalorder %s20, 0
      %p110 = por %p108, %p109
      %s112 = sadd.s32 %s111, 1
      %p115 = scmp.eq.s32.totalorder %s14, 1
      %p116 = scmp.ne.s32.totalorder %s111, %s113
      %p117 = scmp.eq.s32.totalorder %s14, 0
      %p118 = por %p116, %p117
      %p119 = scmp.ne.s32.totalorder %s111, %s113
      %p120 = scmp.eq.s32.totalorder %s19, 1
      %p121 = por %p119, %p120
      %p122 = scmp.ne.s32.totalorder %s113, %s114
      %p123 = scmp.eq.s32.totalorder %s19, 0
      %p124 = por %p122, %p123
      %p125 = scmp.ne.s32.totalorder %s113, %s114
      %p126 = scmp.eq.s32.totalorder %s20, 1
      %p127 = por %p125, %p126
      %p129 = scmp.ne.s32.totalorder %s114, %s128
      %p130 = scmp.eq.s32.totalorder %s20, 0
      %p131 = por %p129, %p130
      %s132 = ssub.s32 %s14, %s21
      %p133 = scmp.eq.s32.totalorder %s132, 0
      %s135 = sadd.s32 %s134, 1
      %s136 = scalar_select %p133, %s134, %s135
      %p139 = pneg %p133
      %p140 = scmp.eq.s32.totalorder %s14, 1
      %p141 = por %p139, %p140
      %p142 = scmp.ne.s32.totalorder %s134, %s137
      %p143 = scmp.eq.s32.totalorder %s14, 0
      %p144 = por %p142, %p143
      %p145 = scmp.ne.s32.totalorder %s134, %s137
      %p146 = scmp.eq.s32.totalorder %s19, 1
      %p147 = por %p145, %p146
      %p148 = scmp.ne.s32.totalorder %s137, %s138
      %p149 = scmp.eq.s32.totalorder %s19, 0
      %p150 = por %p148, %p149
      %p151 = scmp.ne.s32.totalorder %s137, %s138
      %p152 = scmp.eq.s32.totalorder %s20, 1
      %p153 = por %p151, %p152
      %p155 = scmp.ne.s32.totalorder %s138, %s154
      %p156 = scmp.eq.s32.totalorder %s20, 0
      %p157 = por %p155, %p156
      %p158 = scmp.le.s32.totalorder 1, %s14
      %p159 = scmp.lt.s32.totalorder %s14, 3
      %p160 = pnand %p158, %p159
      %p161 = pneg %p160
      // Predicated region
      $region9: #{tpu_custom_call.1} parent=5 // pred_check
        _
      $region10: #{tpu_custom_call.1} parent=5 // pred_check_branch
        %163 = sbr.rel (%p160) target = $region12
      $region11: #{tpu_custom_call.1} parent=5 // pred_region
        %s164 = ssub.s32 %s14, 1
        // Predicated region
        $region13: #{tpu_custom_call.1} parent=11 // pred_check
          %p165 = pneg %p61
        $region14: #{tpu_custom_call.1} parent=11 // pred_check_branch
          %167 = sbr.rel (%p165) target = $region16
        $region15: #{tpu_custom_call.1} parent=11 // pred_region
          _
        $region16: #{tpu_custom_call.1} parent=11 // pred_fallthru
          _
        // Predicated region
        $region17: #{tpu_custom_call.1} parent=11 // pred_check
          %p168 = pneg %p82
        $region18: #{tpu_custom_call.1} parent=11 // pred_check_branch
          %170 = sbr.rel (%p168) target = $region20
        $region19: #{tpu_custom_call.1} parent=11 // pred_region
          _
        $region20: #{tpu_custom_call.1} parent=11 // pred_fallthru
          _
        // Predicated region
        $region21: #{tpu_custom_call.1} parent=11 // pred_check
          %p171 = pneg %p103
        $region22: #{tpu_custom_call.1} parent=11 // pred_check_branch
          %173 = sbr.rel (%p171) target = $region24
        $region23: #{tpu_custom_call.1} parent=11 // pred_region
          _
        $region24: #{tpu_custom_call.1} parent=11 // pred_fallthru
          _
        // Predicated region
        $region25: #{tpu_custom_call.1} parent=11 // pred_check
          %p174 = pneg %p124
        $region26: #{tpu_custom_call.1} parent=11 // pred_check_branch
          %176 = sbr.rel (%p174) target = $region28
        $region27: #{tpu_custom_call.1} parent=11 // pred_region
          _
        $region28: #{tpu_custom_call.1} parent=11 // pred_fallthru
          _
      $region12: #{tpu_custom_call.1} parent=5 // pred_fallthru
        _
      %p177 = scmp.lt.s32.totalorder %s14, 2
      // Predicated region
      $region29: #{tpu_custom_call.1} parent=5 // pred_check
        %p178 = pneg %p177
      $region30: #{tpu_custom_call.1} parent=5 // pred_check_branch
        %180 = sbr.rel (%p178) target = $region32
      $region31: #{tpu_custom_call.1} parent=5 // pred_region
        // Predicated region
        $region33: #{tpu_custom_call.1} parent=31 // pred_check
          %p181 = pneg %p34
        $region34: #{tpu_custom_call.1} parent=31 // pred_check_branch
          %183 = sbr.rel (%p181) target = $region36
        $region35: #{tpu_custom_call.1} parent=31 // pred_region
          %s184 = smul.u32 2, %s14
          %p185 = scmp.lt.s32.totalorder %s184, 3
          %s186 = scalar_select %p185, %s184, 3
          %s187 = smul.addr %s186, 4
          %s188 = smul.addr %s187, 8
          %s189 = scalar_lea.vmem %s0, %s188
          %s190 = smul.u32 2, %s14
        $region36: #{tpu_custom_call.1} parent=31 // pred_fallthru
          _
      $region32: #{tpu_custom_call.1} parent=5 // pred_fallthru
        _
      %p191 = scmp.le.s32.totalorder 1, %s14
      %p192 = scmp.lt.s32.totalorder %s14, 3
      %p193 = pnand %p191, %p192
      %p194 = pneg %p193
      // Predicated region
      $region37: #{tpu_custom_call.1} parent=5 // pred_check
        _
      $region38: #{tpu_custom_call.1} parent=5 // pred_check_branch
        %196 = sbr.rel (%p193) target = $region40
      $region39: #{tpu_custom_call.1} parent=5 // pred_region
        %s197 = ssub.s32 %s14, 1
        %s198 = smul.u32 2, %s19
        %p199 = scmp.lt.s32.totalorder %s198, 3
        %s200 = scalar_select %p199, %s198, 3
        %s201 = smul.addr %s200, 4
        %s202 = smul.addr %s201, 8
        %s203 = scalar_lea.vmem %s0, %s202
        %p204 = pneg %p40
        %p205 = pneg %p37
        %p206 = pneg %p61
        %p207 = pneg %p58
        %p208 = pneg %p82
        %p209 = pneg %p79
        %p210 = pneg %p103
        %p211 = pneg %p100
        %p212 = pneg %p124
        %p213 = pneg %p121
        %p214 = pneg %p150
        %p215 = pneg %p147
        %s216 = sand.u32 %s137, 1
        %s217 = scalar_lea.sflag [#allocation4], %s216
        %s218 = sand.u32 %s137, 1
        %s219 = smul.addr %s218, 64
        %s220 = scalar_lea.vmem [#allocation3], %s219
        %s221 = smul.u32 2, %s19
        %p222 = scmp.lt.s32.totalorder %s221, 3
        %s223 = scalar_select %p222, %s221, 3
        %s224 = smul.addr %s223, 4
        %s225 = smul.addr %s224, 8
        %s226 = scalar_lea.vmem %s0, %s225
        %s227 = smul.u32 2, %s19
        %s228 = smul.u32 2, %s19
        %v229 = vld [vmem:[%s226] sm:$0xff]
        %v230 = vld [vmem:[%s226 + $0x8] sm:$0xff]
        %v231 = vld [vmem:[%s226 + $0x10] sm:$0xff]
        %v232 = vld [vmem:[%s226 + $0x18] sm:$0xff]
        %v233 = vld [vmem:[%s226 + $0x20] sm:$0xff]
        %v234 = vld [vmem:[%s226 + $0x28] sm:$0xff]
        %v235 = vld [vmem:[%s226 + $0x30] sm:$0xff]
        %v236 = vld [vmem:[%s226 + $0x38] sm:$0xff]
        %v237 = vld [vmem:[%s1 + $0x8] sm:$0xff]
        %v238 = vld [vmem:[%s1 + $0x18] sm:$0xff]
        %240 = vset.pattern.permute.xlu0 92
        %241 = vperm.xlu0 %240, %v237
        %v242 = vpop.permute.xlu0 %241
        %245 = vset.pattern.permute.xlu0 92
        %246 = vperm.xlu0 %245, %v238
        %v247 = vpop.permute.xlu0 %246
        %v249 = vmul.f32 %v229, %v242
        %v250 = vmul.f32 %v230, %v242
        %v251 = vmul.f32 %v231, %v247
        %v252 = vmul.f32 %v232, %v247
        %v253 = vmul.f32 %v233, %v242
        %v254 = vmul.f32 %v234, %v242
        %v255 = vmul.f32 %v235, %v247
        %v256 = vmul.f32 %v236, %v247
        %257 = vset.pattern.permute.xlu0 93
        %258 = vperm.xlu0 %257, %v237
        %v259 = vpop.permute.xlu0 %258
        %261 = vset.pattern.permute.xlu0 93
        %262 = vperm.xlu0 %261, %v238
        %v263 = vpop.permute.xlu0 %262
        %v265 = vadd.f32 %v249, %v259
        %v266 = vadd.f32 %v250, %v259
        %v267 = vadd.f32 %v251, %v263
        %v268 = vadd.f32 %v252, %v263
        %v269 = vadd.f32 %v253, %v259
        %v270 = vadd.f32 %v254, %v259
        %v271 = vadd.f32 %v255, %v263
        %v272 = vadd.f32 %v256, %v263
        %v273 = vmax.f32 %v265, 0.0
        %v274 = vmax.f32 %v266, 0.0
        %v275 = vmax.f32 %v267, 0.0
        %v276 = vmax.f32 %v268, 0.0
        %v277 = vmax.f32 %v269, 0.0
        %v278 = vmax.f32 %v270, 0.0
        %v279 = vmax.f32 %v271, 0.0
        %v280 = vmax.f32 %v272, 0.0
        %v281 = vld [vmem:[%s3] sm:$0xff]
        %v282 = vld [vmem:[%s3 + $0x8] sm:$0xff]
        %v283 = vld [vmem:[%s3 + $0x10] sm:$0xff]
        %v284 = vld [vmem:[%s3 + $0x18] sm:$0xff]
        %v285 = vld [vmem:[%s3 + $0x20] sm:$0xff]
        %v286 = vld [vmem:[%s3 + $0x28] sm:$0xff]
        %v287 = vld [vmem:[%s3 + $0x30] sm:$0xff]
        %v288 = vld [vmem:[%s3 + $0x38] sm:$0xff]
        %v289 = vld [vmem:[%s3 + $0x40] sm:$0xff]
        %v290 = vld [vmem:[%s3 + $0x48] sm:$0xff]
        %v291 = vld [vmem:[%s3 + $0x50] sm:$0xff]
        %v292 = vld [vmem:[%s3 + $0x58] sm:$0xff]
        %v293 = vld [vmem:[%s3 + $0x60] sm:$0xff]
        %v294 = vld [vmem:[%s3 + $0x68] sm:$0xff]
        %v295 = vld [vmem:[%s3 + $0x70] sm:$0xff]
        %v296 = vld [vmem:[%s3 + $0x78] sm:$0xff]
        %v297 = vld [vmem:[%s3 + $0x80] sm:$0xff]
        %v298 = vld [vmem:[%s3 + $0x88] sm:$0xff]
        %v299 = vld [vmem:[%s3 + $0x90] sm:$0xff]
        %v300 = vld [vmem:[%s3 + $0x98] sm:$0xff]
        %v301 = vld [vmem:[%s3 + $0xa0] sm:$0xff]
        %v302 = vld [vmem:[%s3 + $0xa8] sm:$0xff]
        %v303 = vld [vmem:[%s3 + $0xb0] sm:$0xff]
        %v304 = vld [vmem:[%s3 + $0xb8] sm:$0xff]
        %v305 = vld [vmem:[%s3 + $0xc0] sm:$0xff]
        %v306 = vld [vmem:[%s3 + $0xc8] sm:$0xff]
        %v307 = vld [vmem:[%s3 + $0xd0] sm:$0xff]
        %v308 = vld [vmem:[%s3 + $0xd8] sm:$0xff]
        %v309 = vld [vmem:[%s3 + $0xe0] sm:$0xff]
        %v310 = vld [vmem:[%s3 + $0xe8] sm:$0xff]
        %v311 = vld [vmem:[%s3 + $0xf0] sm:$0xff]
        %v312 = vld [vmem:[%s3 + $0xf8] sm:$0xff]
        %313 = vmatprep.subr.mxu0 0.0
        %314 = vmatpush1.msra.mxu0 %v281
        %315 = vmatprep.subr.mxu0 0.0
        %316 = vmatpush1.msra.mxu0 %v282
        %317 = vmatprep.subr.mxu0 0.0
        %318 = vmatpush1.msra.mxu0 %v283
        %319 = vmatprep.subr.mxu0 0.0
        %320 = vmatpush1.msra.mxu0 %v284
        %321 = vmatprep.subr.mxu0 0.0
        %322 = vmatpush1.msra.mxu0 %v285
        %323 = vmatprep.subr.mxu0 0.0
        %324 = vmatpush1.msra.mxu0 %v286
        %325 = vmatprep.subr.mxu0 0.0
        %326 = vmatpush1.msra.mxu0 %v287
        %327 = vmatprep.subr.mxu0 0.0
        %328 = vmatpush1.msra.mxu0 %v288
        %329 = vmatprep.subr.mxu0 0.0
        %330 = vmatpush1.msra.mxu0 %v289
        %331 = vmatprep.subr.mxu0 0.0
        %332 = vmatpush1.msra.mxu0 %v290
        %333 = vmatprep.subr.mxu0 0.0
        %334 = vmatpush1.msra.mxu0 %v291
        %335 = vmatprep.subr.mxu0 0.0
        %336 = vmatpush1.msra.mxu0 %v292
        %337 = vmatprep.subr.mxu0 0.0
        %338 = vmatpush1.msra.mxu0 %v293
        %339 = vmatprep.subr.mxu0 0.0
        %340 = vmatpush1.msra.mxu0 %v294
        %341 = vmatprep.subr.mxu0 0.0
        %342 = vmatpush1.msra.mxu0 %v295
        %343 = vmatprep.subr.mxu0 0.0
        %344 = vmatpush1.msra.mxu0 %v296
        %345 = vmatprep.subr.mxu0 0.0
        %346 = vmatpush1.msra.mxu0 %v297
        %347 = vmatprep.subr.mxu0 0.0
        %348 = vmatpush1.msra.mxu0 %v298
        %349 = vmatprep.subr.mxu0 0.0
        %350 = vmatpush1.msra.mxu0 %v299
        %351 = vmatprep.subr.mxu0 0.0
        %352 = vmatpush1.msra.mxu0 %v300
        %353 = vmatprep.subr.mxu0 0.0
        %354 = vmatpush1.msra.mxu0 %v301
        %355 = vmatprep.subr.mxu0 0.0
        %356 = vmatpush1.msra.mxu0 %v302
        %357 = vmatprep.subr.mxu0 0.0
        %358 = vmatpush1.msra.mxu0 %v303
        %359 = vmatprep.subr.mxu0 0.0
        %360 = vmatpush1.msra.mxu0 %v304
        %361 = vmatprep.subr.mxu0 0.0
        %362 = vmatpush1.msra.mxu0 %v305
        %363 = vmatprep.subr.mxu0 0.0
        %364 = vmatpush1.msra.mxu0 %v306
        %365 = vmatprep.subr.mxu0 0.0
        %366 = vmatpush1.msra.mxu0 %v307
        %367 = vmatprep.subr.mxu0 0.0
        %368 = vmatpush1.msra.mxu0 %v308
        %369 = vmatprep.subr.mxu0 0.0
        %370 = vmatpush1.msra.mxu0 %v309
        %371 = vmatprep.subr.mxu0 0.0
        %372 = vmatpush1.msra.mxu0 %v310
        %373 = vmatprep.subr.mxu0 0.0
        %374 = vmatpush1.msra.mxu0 %v311
        %375 = vmatprep.subr.mxu0 0.0
        %376 = vmatpush1.msra.mxu0 %v312
        %377 = vmatprep.mubr.f32.mxu0 %v274
        %378 = vmatmul.mubr.f32.gmra.mrb[0].mxu0 %v273
        %v379 = vpop.f32.mrb[0].mxu0
        %v380 = vadd.f32 0.0, %v379
        %v381 = vpop.f32.mrb[0].mxu0
        %382 = vmatprep.mubr.f32.mxu0 %v276
        %383 = vmatmul.mubr.f32.gmra.mrb[0].mxu0 %v275
        %v384 = vpop.f32.mrb[0].mxu0
        %v385 = vadd.f32 0.0, %v384
        %v386 = vpop.f32.mrb[0].mxu0
        %387 = vmatprep.mubr.f32.mxu0 %v278
        %388 = vmatmul.mubr.f32.gmra.mrb[0].mxu0 %v277
        %v389 = vpop.f32.mrb[0].mxu0
        %v390 = vadd.f32 0.0, %v389
        %v391 = vpop.f32.mrb[0].mxu0
        %392 = vmatprep.mubr.f32.mxu0 %v280
        %393 = vmatmul.mubr.f32.gmra.mrb[0].mxu0 %v279
        %v394 = vpop.f32.mrb[0].mxu0
        %v395 = vadd.f32 0.0, %v394
        %v396 = vpop.f32.mrb[0].mxu0
        %397 = vdwg.mxu0
        %400 = vrot.lane.b32.xlu0 %v390, 16
        %v401 = vpop.permute.xlu0 %400
        %402 = vrot.lane.b32.xlu0 %v395, 16
        %v403 = vpop.permute.xlu0 %402
        %vm406 = vcmask 130048
        %v407 = vsel %vm406, %v380, %v401
        %v408 = vsel %vm406, %v385, %v403
        %v409 = vld [vmem:[%s1] sm:$0xf]
        %v410 = vld [vmem:[%s1 + $0x8] sm:$0xf]
        %412 = vset.pattern.permute.xlu0 94
        %413 = vperm.xlu0 %412, %v410
        %v414 = vpop.permute.xlu0 %413
        %v417 = vsel %vm406, %v409, 0
        %419 = vmatprep.subr.mxu0 0.0
        %420 = vmatpush1.msra.mxu0 %v407
        %421 = vmatprep.subr.mxu0 0.0
        %422 = vmatpush1.msra.mxu0 %v408
        %423 = vmatprep.subr.mxu0 0.0
        %424 = vmatpush1.msra.mxu0 0.0
        %425 = vmatprep.subr.mxu0 0.0
        %426 = vmatpush1.msra.mxu0 0.0
        %427 = vmatprep.subr.mxu0 0.0
        %428 = vmatpush1.msra.mxu0 0.0
        %429 = vmatprep.subr.mxu0 0.0
        %430 = vmatpush1.msra.mxu0 0.0
        %431 = vmatprep.subr.mxu0 0.0
        %432 = vmatpush1.msra.mxu0 0.0
        %433 = vmatprep.subr.mxu0 0.0
        %434 = vmatpush1.msra.mxu0 0.0
        %435 = vmatprep.subr.mxu0 0.0
        %436 = vmatpush1.msra.mxu0 0.0
        %437 = vmatprep.subr.mxu0 0.0
        %438 = vmatpush1.msra.mxu0 0.0
        %439 = vmatprep.subr.mxu0 0.0
        %440 = vmatpush1.msra.mxu0 0.0
        %441 = vmatprep.subr.mxu0 0.0
        %442 = vmatpush1.msra.mxu0 0.0
        %443 = vmatprep.subr.mxu0 0.0
        %444 = vmatpush1.msra.mxu0 0.0
        %445 = vmatprep.subr.mxu0 0.0
        %446 = vmatpush1.msra.mxu0 0.0
        %447 = vmatprep.subr.mxu0 0.0
        %448 = vmatpush1.msra.mxu0 0.0
        %449 = vmatprep.subr.mxu0 0.0
        %450 = vmatpush1.msra.mxu0 0.0
        %451 = vmatprep.subr.mxu0 0.0
        %452 = vmatpush1.msra.mxu0 0.0
        %453 = vmatprep.subr.mxu0 0.0
        %454 = vmatpush1.msra.mxu0 0.0
        %455 = vmatprep.subr.mxu0 0.0
        %456 = vmatpush1.msra.mxu0 0.0
        %457 = vmatprep.subr.mxu0 0.0
        %458 = vmatpush1.msra.mxu0 0.0
        %459 = vmatprep.subr.mxu0 0.0
        %460 = vmatpush1.msra.mxu0 0.0
        %461 = vmatprep.subr.mxu0 0.0
        %462 = vmatpush1.msra.mxu0 0.0
        %463 = vmatprep.subr.mxu0 0.0
        %464 = vmatpush1.msra.mxu0 0.0
        %465 = vmatprep.subr.mxu0 0.0
        %466 = vmatpush1.msra.mxu0 0.0
        %467 = vmatprep.subr.mxu0 0.0
        %468 = vmatpush1.msra.mxu0 0.0
        %469 = vmatprep.subr.mxu0 0.0
        %470 = vmatpush1.msra.mxu0 0.0
        %471 = vmatprep.subr.mxu0 0.0
        %472 = vmatpush1.msra.mxu0 0.0
        %473 = vmatprep.subr.mxu0 0.0
        %474 = vmatpush1.msra.mxu0 0.0
        %475 = vmatprep.subr.mxu0 0.0
        %476 = vmatpush1.msra.mxu0 0.0
        %477 = vmatprep.subr.mxu0 0.0
        %478 = vmatpush1.msra.mxu0 0.0
        %479 = vmatprep.subr.mxu0 0.0
        %480 = vmatpush1.msra.mxu0 0.0
        %481 = vmatprep.subr.mxu0 0.0
        %482 = vmatpush1.msra.mxu0 0.0
        %483 = vmatprep.mubr.f32.mxu0 0.0
        %484 = vmatmul.mubr.f32.gmra.mrb[0].mxu0 %v417
        %v485 = vpop.f32.mrb[0].mxu0
        %v486 = vadd.f32 %v414, %v485
        %v487 = vpop.f32.mrb[0].mxu0
        %488 = vdwg.mxu0
        %v489 = vld [vmem:[%s4] sm:$0xff]
        %v490 = vld [vmem:[%s4 + $0x8] sm:$0xff]
        %v491 = vld [vmem:[%s4 + $0x10] sm:$0xff]
        %v492 = vld [vmem:[%s4 + $0x28] sm:$0xff]
        %v493 = vld [vmem:[%s4 + $0x30] sm:$0xff]
        %v494 = vld [vmem:[%s4 + $0x38] sm:$0xff]
        %v495 = vld [vmem:[%s4 + $0x50] sm:$0xff]
        %v496 = vld [vmem:[%s4 + $0x58] sm:$0xff]
        %v497 = vld [vmem:[%s4 + $0x60] sm:$0xff]
        %v498 = vld [vmem:[%s4 + $0x78] sm:$0xff]
        %v499 = vld [vmem:[%s4 + $0x80] sm:$0xff]
        %v500 = vld [vmem:[%s4 + $0x88] sm:$0xff]
        %vm501 = vcmask 261120
        %v503 = vsel %vm501, %v486, 0
        %505 = vmatprep.subr.mxu0 %v490
        %506 = vmatpush1.msra.mxu0 %v489
        %507 = vmatprep.subr.mxu0 %v493
        %508 = vmatpush1.msra.mxu0 %v492
        %509 = vmatprep.subr.mxu0 %v496
        %510 = vmatpush1.msra.mxu0 %v495
        %511 = vmatprep.subr.mxu0 %v499
        %512 = vmatpush1.msra.mxu0 %v498
        %513 = vmatprep.subr.mxu0 0.0
        %514 = vmatpush1.msra.mxu0 0.0
        %515 = vmatprep.subr.mxu0 0.0
        %516 = vmatpush1.msra.mxu0 0.0
        %517 = vmatprep.subr.mxu0 0.0
        %518 = vmatpush1.msra.mxu0 0.0
        %519 = vmatprep.subr.mxu0 0.0
        %520 = vmatpush1.msra.mxu0 0.0
        %521 = vmatprep.subr.mxu0 0.0
        %522 = vmatpush1.msra.mxu0 0.0
        %523 = vmatprep.subr.mxu0 0.0
        %524 = vmatpush1.msra.mxu0 0.0
        %525 = vmatprep.subr.mxu0 0.0
        %526 = vmatpush1.msra.mxu0 0.0
        %527 = vmatprep.subr.mxu0 0.0
        %528 = vmatpush1.msra.mxu0 0.0
        %529 = vmatprep.subr.mxu0 0.0
        %530 = vmatpush1.msra.mxu0 0.0
        %531 = vmatprep.subr.mxu0 0.0
        %532 = vmatpush1.msra.mxu0 0.0
        %533 = vmatprep.subr.mxu0 0.0
        %534 = vmatpush1.msra.mxu0 0.0
        %535 = vmatprep.subr.mxu0 0.0
        %536 = vmatpush1.msra.mxu0 0.0
        %537 = vmatprep.subr.mxu0 0.0
        %538 = vmatpush1.msra.mxu0 0.0
        %539 = vmatprep.subr.mxu0 0.0
        %540 = vmatpush1.msra.mxu0 0.0
        %541 = vmatprep.subr.mxu0 0.0
        %542 = vmatpush1.msra.mxu0 0.0
        %543 = vmatprep.subr.mxu0 0.0
        %544 = vmatpush1.msra.mxu0 0.0
        %545 = vmatprep.subr.mxu0 0.0
        %546 = vmatpush1.msra.mxu0 0.0
        %547 = vmatprep.subr.mxu0 0.0
        %548 = vmatpush1.msra.mxu0 0.0
        %549 = vmatprep.subr.mxu0 0.0
        %550 = vmatpush1.msra.mxu0 0.0
        %551 = vmatprep.subr.mxu0 0.0
        %552 = vmatpush1.msra.mxu0 0.0
        %553 = vmatprep.subr.mxu0 0.0
        %554 = vmatpush1.msra.mxu0 0.0
        %555 = vmatprep.subr.mxu0 0.0
        %556 = vmatpush1.msra.mxu0 0.0
        %557 = vmatprep.subr.mxu0 0.0
        %558 = vmatpush1.msra.mxu0 0.0
        %559 = vmatprep.subr.mxu0 0.0
        %560 = vmatpush1.msra.mxu0 0.0
        %561 = vmatprep.subr.mxu0 0.0
        %562 = vmatpush1.msra.mxu0 0.0
        %563 = vmatprep.subr.mxu0 0.0
        %564 = vmatpush1.msra.mxu0 0.0
        %565 = vmatprep.subr.mxu0 0.0
        %566 = vmatpush1.msra.mxu0 0.0
        %567 = vmatprep.subr.mxu0 0.0
        %568 = vmatpush1.msra.mxu0 0.0
        %569 = vmatprep.mubr.f32.mxu0 0.0
        %570 = vmatmul.mubr.f32.gmra.mrb[0].mxu0 %v503
        %v571 = vpop.f32.mrb[0].mxu0
        %v572 = vadd.f32 0.0, %v571
        %v573 = vpop.f32.mrb[0].mxu0
        %v574 = vadd.f32 0.0, %v573
        %575 = vdwg.mxu0
        %576 = vmatprep.subr.mxu0 0.0
        %577 = vmatpush1.msra.mxu0 %v491
        %578 = vmatprep.subr.mxu0 0.0
        %579 = vmatpush1.msra.mxu0 %v494
        %580 = vmatprep.subr.mxu0 0.0
        %581 = vmatpush1.msra.mxu0 %v497
        %582 = vmatprep.subr.mxu0 0.0
        %583 = vmatpush1.msra.mxu0 %v500
        %584 = vmatprep.subr.mxu0 0.0
        %585 = vmatpush1.msra.mxu0 0.0
        %586 = vmatprep.subr.mxu0 0.0
        %587 = vmatpush1.msra.mxu0 0.0
        %588 = vmatprep.subr.mxu0 0.0
        %589 = vmatpush1.msra.mxu0 0.0
        %590 = vmatprep.subr.mxu0 0.0
        %591 = vmatpush1.msra.mxu0 0.0
        %592 = vmatprep.subr.mxu0 0.0
        %593 = vmatpush1.msra.mxu0 0.0
        %594 = vmatprep.subr.mxu0 0.0
        %595 = vmatpush1.msra.mxu0 0.0
        %596 = vmatprep.subr.mxu0 0.0
        %597 = vmatpush1.msra.mxu0 0.0
        %598 = vmatprep.subr.mxu0 0.0
        %599 = vmatpush1.msra.mxu0 0.0
        %600 = vmatprep.subr.mxu0 0.0
        %601 = vmatpush1.msra.mxu0 0.0
        %602 = vmatprep.subr.mxu0 0.0
        %603 = vmatpush1.msra.mxu0 0.0
        %604 = vmatprep.subr.mxu0 0.0
        %605 = vmatpush1.msra.mxu0 0.0
        %606 = vmatprep.subr.mxu0 0.0
        %607 = vmatpush1.msra.mxu0 0.0
        %608 = vmatprep.subr.mxu0 0.0
        %609 = vmatpush1.msra.mxu0 0.0
        %610 = vmatprep.subr.mxu0 0.0
        %611 = vmatpush1.msra.mxu0 0.0
        %612 = vmatprep.subr.mxu0 0.0
        %613 = vmatpush1.msra.mxu0 0.0
        %614 = vmatprep.subr.mxu0 0.0
        %615 = vmatpush1.msra.mxu0 0.0
        %616 = vmatprep.subr.mxu0 0.0
        %617 = vmatpush1.msra.mxu0 0.0
        %618 = vmatprep.subr.mxu0 0.0
        %619 = vmatpush1.msra.mxu0 0.0
        %620 = vmatprep.subr.mxu0 0.0
        %621 = vmatpush1.msra.mxu0 0.0
        %622 = vmatprep.subr.mxu0 0.0
        %623 = vmatpush1.msra.mxu0 0.0
        %624 = vmatprep.subr.mxu0 0.0
        %625 = vmatpush1.msra.mxu0 0.0
        %626 = vmatprep.subr.mxu0 0.0
        %627 = vmatpush1.msra.mxu0 0.0
        %628 = vmatprep.subr.mxu0 0.0
        %629 = vmatpush1.msra.mxu0 0.0
        %630 = vmatprep.subr.mxu0 0.0
        %631 = vmatpush1.msra.mxu0 0.0
        %632 = vmatprep.subr.mxu0 0.0
        %633 = vmatpush1.msra.mxu0 0.0
        %634 = vmatprep.subr.mxu0 0.0
        %635 = vmatpush1.msra.mxu0 0.0
        %636 = vmatprep.subr.mxu0 0.0
        %637 = vmatpush1.msra.mxu0 0.0
        %638 = vmatprep.subr.mxu0 0.0
        %639 = vmatpush1.msra.mxu0 0.0
        %640 = vmatprep.mubr.f32.mxu0 0.0
        %641 = vmatmul.mubr.f32.gmra.mrb[0].mxu0 %v503
        %v642 = vpop.f32.mrb[0].mxu0
        %v643 = vadd.f32 0.0, %v642
        %v644 = vpop.f32.mrb[0].mxu0
        %645 = vdwg.mxu0
        %vm646 = vcmask 257024
        %647 = vst.msk [vmem:[#allocation2] sm:$0xf] %vm646, %v572
        %649 = vrot.lane.b32.xlu0 %v572, 96
        %v650 = vpop.permute.xlu0 %649
        %652 = vst.msk [vmem:[#allocation2 + $0x4] sm:$0xf] %vm646, %v650
        %653 = vrot.lane.b32.xlu0 %v572, 64
        %v654 = vpop.permute.xlu0 %653
        %656 = vst.msk [vmem:[#allocation2 + $0x8] sm:$0xf] %vm646, %v654
        %657 = vrot.lane.b32.xlu0 %v572, 32
        %v658 = vpop.permute.xlu0 %657
        %660 = vst.msk [vmem:[#allocation2 + $0xc] sm:$0xf] %vm646, %v658
        %661 = vst.msk [vmem:[#allocation2 + $0x10] sm:$0xf] %vm646, %v574
        %663 = vrot.lane.b32.xlu0 %v574, 96
        %v664 = vpop.permute.xlu0 %663
        %666 = vst.msk [vmem:[#allocation2 + $0x14] sm:$0xf] %vm646, %v664
        %667 = vrot.lane.b32.xlu0 %v574, 64
        %v668 = vpop.permute.xlu0 %667
        %670 = vst.msk [vmem:[#allocation2 + $0x18] sm:$0xf] %vm646, %v668
        %671 = vrot.lane.b32.xlu0 %v574, 32
        %v672 = vpop.permute.xlu0 %671
        %674 = vst.msk [vmem:[#allocation2 + $0x1c] sm:$0xf] %vm646, %v672
        %675 = vst.msk [vmem:[#allocation2 + $0x20] sm:$0xf] %vm646, %v643
        %v676 = vld [vmem:[#allocation2] sm:$0xff]
        %v677 = vld [vmem:[#allocation2 + $0x8] sm:$0xff]
        %v678 = vld [vmem:[#allocation2 + $0x10] sm:$0xff]
        %v679 = vld [vmem:[#allocation2 + $0x18] sm:$0xff]
        %v680 = vld [vmem:[#allocation2 + $0x20] sm:$0xf]
        %v681 = vld [vmem:[%s2] sm:$0xff]
        %v682 = vld [vmem:[%s2 + $0x8] sm:$0xff]
        %v683 = vld [vmem:[%s2 + $0x10] sm:$0xff]
        %v684 = vld [vmem:[%s2 + $0x18] sm:$0xff]
        %v685 = vld [vmem:[%s2 + $0x20] sm:$0xff]
        %v686 = vld [vmem:[%s2 + $0x28] sm:$0xff]
        %v687 = vld [vmem:[%s2 + $0x30] sm:$0xff]
        %v688 = vld [vmem:[%s2 + $0x38] sm:$0xff]
        %v689 = vld [vmem:[%s2 + $0x40] sm:$0xff]
        %v690 = vld [vmem:[%s2 + $0x48] sm:$0xff]
        %v691 = vld [vmem:[%s2 + $0x50] sm:$0xff]
        %v692 = vld [vmem:[%s2 + $0x58] sm:$0xff]
        %v693 = vld [vmem:[%s2 + $0x60] sm:$0xff]
        %v694 = vld [vmem:[%s2 + $0x68] sm:$0xff]
        %v695 = vld [vmem:[%s2 + $0x70] sm:$0xff]
        %v696 = vld [vmem:[%s2 + $0x78] sm:$0xff]
        %v697 = vld [vmem:[%s2 + $0x80] sm:$0xff]
        %v698 = vld [vmem:[%s2 + $0x88] sm:$0xff]
        %v699 = vld [vmem:[%s2 + $0x90] sm:$0xff]
        %v700 = vld [vmem:[%s2 + $0x98] sm:$0xff]
        %v701 = vld [vmem:[%s2 + $0xa0] sm:$0xff]
        %v702 = vld [vmem:[%s2 + $0xa8] sm:$0xff]
        %v703 = vld [vmem:[%s2 + $0xb0] sm:$0xff]
        %v704 = vld [vmem:[%s2 + $0xb8] sm:$0xff]
        %v705 = vld [vmem:[%s2 + $0xc0] sm:$0xff]
        %v706 = vld [vmem:[%s2 + $0xc8] sm:$0xff]
        %v707 = vld [vmem:[%s2 + $0xd0] sm:$0xff]
        %v708 = vld [vmem:[%s2 + $0xd8] sm:$0xff]
        %v709 = vld [vmem:[%s2 + $0xe0] sm:$0xff]
        %v710 = vld [vmem:[%s2 + $0xe8] sm:$0xff]
        %v711 = vld [vmem:[%s2 + $0xf0] sm:$0xff]
        %v712 = vld [vmem:[%s2 + $0xf8] sm:$0xff]
        %v713 = vld [vmem:[%s2 + $0x100] sm:$0xff]
        %v714 = vld [vmem:[%s2 + $0x108] sm:$0xff]
        %v715 = vld [vmem:[%s2 + $0x110] sm:$0xff]
        %v716 = vld [vmem:[%s2 + $0x118] sm:$0xff]
        %v717 = vld [vmem:[%s2 + $0x120] sm:$0xff]
        %v718 = vld [vmem:[%s2 + $0x128] sm:$0xff]
        %v719 = vld [vmem:[%s2 + $0x130] sm:$0xff]
        %v720 = vld [vmem:[%s2 + $0x138] sm:$0xff]
        %v721 = vld [vmem:[%s2 + $0x140] sm:$0xff]
        %v722 = vld [vmem:[%s2 + $0x148] sm:$0xff]
        %v723 = vld [vmem:[%s2 + $0x150] sm:$0xff]
        %v724 = vld [vmem:[%s2 + $0x158] sm:$0xff]
        %v725 = vld [vmem:[%s2 + $0x160] sm:$0xff]
        %v726 = vld [vmem:[%s2 + $0x168] sm:$0xff]
        %v727 = vld [vmem:[%s2 + $0x170] sm:$0xff]
        %vm728 = vcmask 293888
        %v730 = vsel %vm728, %v681, 0
        %v733 = vsel %vm728, %v682, 0
        %v736 = vsel %vm728, %v683, 0
        %v739 = vsel %vm728, %v684, 0
        %v742 = vsel %vm728, %v685, 0
        %v745 = vsel %vm728, %v686, 0
        %v748 = vsel %vm728, %v687, 0
        %v751 = vsel %vm728, %v688, 0
        %v754 = vsel %vm728, %v689, 0
        %v757 = vsel %vm728, %v690, 0
        %v760 = vsel %vm728, %v691, 0
        %v763 = vsel %vm728, %v692, 0
        %v766 = vsel %vm728, %v693, 0
        %v769 = vsel %vm728, %v694, 0
        %v772 = vsel %vm728, %v695, 0
        %v775 = vsel %vm728, %v696, 0
        %v778 = vsel %vm728, %v697, 0
        %v781 = vsel %vm728, %v698, 0
        %v784 = vsel %vm728, %v699, 0
        %v787 = vsel %vm728, %v700, 0
        %v790 = vsel %vm728, %v701, 0
        %v793 = vsel %vm728, %v702, 0
        %v796 = vsel %vm728, %v703, 0
        %v799 = vsel %vm728, %v704, 0
        %v802 = vsel %vm728, %v705, 0
        %v805 = vsel %vm728, %v706, 0
        %v808 = vsel %vm728, %v707, 0
        %v811 = vsel %vm728, %v708, 0
        %v814 = vsel %vm728, %v709, 0
        %v817 = vsel %vm728, %v710, 0
        %v820 = vsel %vm728, %v711, 0
        %v823 = vsel %vm728, %v712, 0
        %v826 = vsel %vm728, %v713, 0
        %v829 = vsel %vm728, %v714, 0
        %v832 = vsel %vm728, %v715, 0
        %v835 = vsel %vm728, %v716, 0
        %v838 = vsel %vm728, %v717, 0
        %v841 = vsel %vm728, %v718, 0
        %v844 = vsel %vm728, %v719, 0
        %v847 = vsel %vm728, %v720, 0
        %v850 = vsel %vm728, %v721, 0
        %v853 = vsel %vm728, %v722, 0
        %v856 = vsel %vm728, %v723, 0
        %v859 = vsel %vm728, %v724, 0
        %v862 = vsel %vm728, %v725, 0
        %v865 = vsel %vm728, %v726, 0
        %v868 = vsel %vm728, %v727, 0
        %vm870 = vcmask 1043456
        %v872 = vsel %vm870, %v680, 0
        %874 = vmatprep.subr.mxu0 0.0
        %875 = vmatpush1.msra.mxu0 %v676
        %876 = vmatprep.subr.mxu0 0.0
        %877 = vmatpush1.msra.mxu0 %v677
        %878 = vmatprep.subr.mxu0 0.0
        %879 = vmatpush1.msra.mxu0 %v678
        %880 = vmatprep.subr.mxu0 0.0
        %881 = vmatpush1.msra.mxu0 %v679
        %882 = vmatprep.subr.mxu0 0.0
        %883 = vmatpush1.msra.mxu0 %v872
        %884 = vmatprep.subr.mxu0 0.0
        %885 = vmatpush1.msra.mxu0 0.0
        %886 = vmatprep.subr.mxu0 0.0
        %887 = vmatpush1.msra.mxu0 0.0
        %888 = vmatprep.subr.mxu0 0.0
        %889 = vmatpush1.msra.mxu0 0.0
        %890 = vmatprep.subr.mxu0 0.0
        %891 = vmatpush1.msra.mxu0 0.0
        %892 = vmatprep.subr.mxu0 0.0
        %893 = vmatpush1.msra.mxu0 0.0
        %894 = vmatprep.subr.mxu0 0.0
        %895 = vmatpush1.msra.mxu0 0.0
        %896 = vmatprep.subr.mxu0 0.0
        %897 = vmatpush1.msra.mxu0 0.0
        %898 = vmatprep.subr.mxu0 0.0
        %899 = vmatpush1.msra.mxu0 0.0
        %900 = vmatprep.subr.mxu0 0.0
        %901 = vmatpush1.msra.mxu0 0.0
        %902 = vmatprep.subr.mxu0 0.0
        %903 = vmatpush1.msra.mxu0 0.0
        %904 = vmatprep.subr.mxu0 0.0
        %905 = vmatpush1.msra.mxu0 0.0
        %906 = vmatprep.subr.mxu0 0.0
        %907 = vmatpush1.msra.mxu0 0.0
        %908 = vmatprep.subr.mxu0 0.0
        %909 = vmatpush1.msra.mxu0 0.0
        %910 = vmatprep.subr.mxu0 0.0
        %911 = vmatpush1.msra.mxu0 0.0
        %912 = vmatprep.subr.mxu0 0.0
        %913 = vmatpush1.msra.mxu0 0.0
        %914 = vmatprep.subr.mxu0 0.0
        %915 = vmatpush1.msra.mxu0 0.0
        %916 = vmatprep.subr.mxu0 0.0
        %917 = vmatpush1.msra.mxu0 0.0
        %918 = vmatprep.subr.mxu0 0.0
        %919 = vmatpush1.msra.mxu0 0.0
        %920 = vmatprep.subr.mxu0 0.0
        %921 = vmatpush1.msra.mxu0 0.0
        %922 = vmatprep.subr.mxu0 0.0
        %923 = vmatpush1.msra.mxu0 0.0
        %924 = vmatprep.subr.mxu0 0.0
        %925 = vmatpush1.msra.mxu0 0.0
        %926 = vmatprep.subr.mxu0 0.0
        %927 = vmatpush1.msra.mxu0 0.0
        %928 = vmatprep.subr.mxu0 0.0
        %929 = vmatpush1.msra.mxu0 0.0
        %930 = vmatprep.subr.mxu0 0.0
        %931 = vmatpush1.msra.mxu0 0.0
        %932 = vmatprep.subr.mxu0 0.0
        %933 = vmatpush1.msra.mxu0 0.0
        %934 = vmatprep.subr.mxu0 0.0
        %935 = vmatpush1.msra.mxu0 0.0
        %936 = vmatprep.subr.mxu0 0.0
        %937 = vmatpush1.msra.mxu0 0.0
        %938 = vmatprep.mubr.f32.mxu0 0.0
        %939 = vmatmul.mubr.f32.gmra.mrb[0].mxu0 %v730
        %v940 = vpop.f32.mrb[0].mxu0
        %v941 = vadd.f32 0.0, %v940
        %v942 = vpop.f32.mrb[0].mxu0
        %943 = vmatprep.mubr.f32.mxu0 0.0
        %944 = vmatmul.mubr.f32.gmra.mrb[0].mxu0 %v733
        %v945 = vpop.f32.mrb[0].mxu0
        %v946 = vadd.f32 0.0, %v945
        %v947 = vpop.f32.mrb[0].mxu0
        %948 = vmatprep.mubr.f32.mxu0 0.0
        %949 = vmatmul.mubr.f32.gmra.mrb[0].mxu0 %v736
        %v950 = vpop.f32.mrb[0].mxu0
        %v951 = vadd.f32 0.0, %v950
        %v952 = vpop.f32.mrb[0].mxu0
        %953 = vmatprep.mubr.f32.mxu0 0.0
        %954 = vmatmul.mubr.f32.gmra.mrb[0].mxu0 %v739
        %v955 = vpop.f32.mrb[0].mxu0
        %v956 = vadd.f32 0.0, %v955
        %v957 = vpop.f32.mrb[0].mxu0
        %958 = vmatprep.mubr.f32.mxu0 0.0
        %959 = vmatmul.mubr.f32.gmra.mrb[0].mxu0 %v742
        %v960 = vpop.f32.mrb[0].mxu0
        %v961 = vadd.f32 0.0, %v960
        %v962 = vpop.f32.mrb[0].mxu0
        %963 = vmatprep.mubr.f32.mxu0 0.0
        %964 = vmatmul.mubr.f32.gmra.mrb[0].mxu0 %v745
        %v965 = vpop.f32.mrb[0].mxu0
        %v966 = vadd.f32 0.0, %v965
        %v967 = vpop.f32.mrb[0].mxu0
        %968 = vmatprep.mubr.f32.mxu0 0.0
        %969 = vmatmul.mubr.f32.gmra.mrb[0].mxu0 %v748
        %v970 = vpop.f32.mrb[0].mxu0
        %v971 = vadd.f32 0.0, %v970
        %v972 = vpop.f32.mrb[0].mxu0
        %973 = vmatprep.mubr.f32.mxu0 0.0
        %974 = vmatmul.mubr.f32.gmra.mrb[0].mxu0 %v751
        %v975 = vpop.f32.mrb[0].mxu0
        %v976 = vadd.f32 0.0, %v975
        %v977 = vpop.f32.mrb[0].mxu0
        %978 = vmatprep.mubr.f32.mxu0 0.0
        %979 = vmatmul.mubr.f32.gmra.mrb[0].mxu0 %v754
        %v980 = vpop.f32.mrb[0].mxu0
        %v981 = vadd.f32 0.0, %v980
        %v982 = vpop.f32.mrb[0].mxu0
        %983 = vmatprep.mubr.f32.mxu0 0.0
        %984 = vmatmul.mubr.f32.gmra.mrb[0].mxu0 %v757
        %v985 = vpop.f32.mrb[0].mxu0
        %v986 = vadd.f32 0.0, %v985
        %v987 = vpop.f32.mrb[0].mxu0
        %988 = vmatprep.mubr.f32.mxu0 0.0
        %989 = vmatmul.mubr.f32.gmra.mrb[0].mxu0 %v760
        %v990 = vpop.f32.mrb[0].mxu0
        %v991 = vadd.f32 0.0, %v990
        %v992 = vpop.f32.mrb[0].mxu0
        %993 = vmatprep.mubr.f32.mxu0 0.0
        %994 = vmatmul.mubr.f32.gmra.mrb[0].mxu0 %v763
        %v995 = vpop.f32.mrb[0].mxu0
        %v996 = vadd.f32 0.0, %v995
        %v997 = vpop.f32.mrb[0].mxu0
        %998 = vmatprep.mubr.f32.mxu0 0.0
        %999 = vmatmul.mubr.f32.gmra.mrb[0].mxu0 %v766
        %v1000 = vpop.f32.mrb[0].mxu0
        %v1001 = vadd.f32 0.0, %v1000
        %v1002 = vpop.f32.mrb[0].mxu0
        %1003 = vmatprep.mubr.f32.mxu0 0.0
        %1004 = vmatmul.mubr.f32.gmra.mrb[0].mxu0 %v769
        %v1005 = vpop.f32.mrb[0].mxu0
        %v1006 = vadd.f32 0.0, %v1005
        %v1007 = vpop.f32.mrb[0].mxu0
        %1008 = vmatprep.mubr.f32.mxu0 0.0
        %1009 = vmatmul.mubr.f32.gmra.mrb[0].mxu0 %v772
        %v1010 = vpop.f32.mrb[0].mxu0
        %v1011 = vadd.f32 0.0, %v1010
        %v1012 = vpop.f32.mrb[0].mxu0
        %1013 = vmatprep.mubr.f32.mxu0 0.0
        %1014 = vmatmul.mubr.f32.gmra.mrb[0].mxu0 %v775
        %v1015 = vpop.f32.mrb[0].mxu0
        %v1016 = vadd.f32 0.0, %v1015
        %v1017 = vpop.f32.mrb[0].mxu0
        %1018 = vmatprep.mubr.f32.mxu0 0.0
        %1019 = vmatmul.mubr.f32.gmra.mrb[0].mxu0 %v778
        %v1020 = vpop.f32.mrb[0].mxu0
        %v1021 = vadd.f32 0.0, %v1020
        %v1022 = vpop.f32.mrb[0].mxu0
        %1023 = vmatprep.mubr.f32.mxu0 0.0
        %1024 = vmatmul.mubr.f32.gmra.mrb[0].mxu0 %v781
        %v1025 = vpop.f32.mrb[0].mxu0
        %v1026 = vadd.f32 0.0, %v1025
        %v1027 = vpop.f32.mrb[0].mxu0
        %1028 = vmatprep.mubr.f32.mxu0 0.0
        %1029 = vmatmul.mubr.f32.gmra.mrb[0].mxu0 %v784
        %v1030 = vpop.f32.mrb[0].mxu0
        %v1031 = vadd.f32 0.0, %v1030
        %v1032 = vpop.f32.mrb[0].mxu0
        %1033 = vmatprep.mubr.f32.mxu0 0.0
        %1034 = vmatmul.mubr.f32.gmra.mrb[0].mxu0 %v787
        %v1035 = vpop.f32.mrb[0].mxu0
        %v1036 = vadd.f32 0.0, %v1035
        %v1037 = vpop.f32.mrb[0].mxu0
        %1038 = vmatprep.mubr.f32.mxu0 0.0
        %1039 = vmatmul.mubr.f32.gmra.mrb[0].mxu0 %v790
        %v1040 = vpop.f32.mrb[0].mxu0
        %v1041 = vadd.f32 0.0, %v1040
        %v1042 = vpop.f32.mrb[0].mxu0
        %1043 = vmatprep.mubr.f32.mxu0 0.0
        %1044 = vmatmul.mubr.f32.gmra.mrb[0].mxu0 %v793
        %v1045 = vpop.f32.mrb[0].mxu0
        %v1046 = vadd.f32 0.0, %v1045
        %v1047 = vpop.f32.mrb[0].mxu0
        %1048 = vmatprep.mubr.f32.mxu0 0.0
        %1049 = vmatmul.mubr.f32.gmra.mrb[0].mxu0 %v796
        %v1050 = vpop.f32.mrb[0].mxu0
        %v1051 = vadd.f32 0.0, %v1050
        %v1052 = vpop.f32.mrb[0].mxu0
        %1053 = vmatprep.mubr.f32.mxu0 0.0
        %1054 = vmatmul.mubr.f32.gmra.mrb[0].mxu0 %v799
        %v1055 = vpop.f32.mrb[0].mxu0
        %v1056 = vadd.f32 0.0, %v1055
        %v1057 = vpop.f32.mrb[0].mxu0
        %1058 = vmatprep.mubr.f32.mxu0 0.0
        %1059 = vmatmul.mubr.f32.gmra.mrb[0].mxu0 %v802
        %v1060 = vpop.f32.mrb[0].mxu0
        %v1061 = vadd.f32 0.0, %v1060
        %v1062 = vpop.f32.mrb[0].mxu0
        %1063 = vmatprep.mubr.f32.mxu0 0.0
        %1064 = vmatmul.mubr.f32.gmra.mrb[0].mxu0 %v805
        %v1065 = vpop.f32.mrb[0].mxu0
        %v1066 = vadd.f32 0.0, %v1065
        %v1067 = vpop.f32.mrb[0].mxu0
        %1068 = vmatprep.mubr.f32.mxu0 0.0
        %1069 = vmatmul.mubr.f32.gmra.mrb[0].mxu0 %v808
        %v1070 = vpop.f32.mrb[0].mxu0
        %v1071 = vadd.f32 0.0, %v1070
        %v1072 = vpop.f32.mrb[0].mxu0
        %1073 = vmatprep.mubr.f32.mxu0 0.0
        %1074 = vmatmul.mubr.f32.gmra.mrb[0].mxu0 %v811
        %v1075 = vpop.f32.mrb[0].mxu0
        %v1076 = vadd.f32 0.0, %v1075
        %v1077 = vpop.f32.mrb[0].mxu0
        %1078 = vmatprep.mubr.f32.mxu0 0.0
        %1079 = vmatmul.mubr.f32.gmra.mrb[0].mxu0 %v814
        %v1080 = vpop.f32.mrb[0].mxu0
        %v1081 = vadd.f32 0.0, %v1080
        %v1082 = vpop.f32.mrb[0].mxu0
        %1083 = vmatprep.mubr.f32.mxu0 0.0
        %1084 = vmatmul.mubr.f32.gmra.mrb[0].mxu0 %v817
        %v1085 = vpop.f32.mrb[0].mxu0
        %v1086 = vadd.f32 0.0, %v1085
        %v1087 = vpop.f32.mrb[0].mxu0
        %1088 = vmatprep.mubr.f32.mxu0 0.0
        %1089 = vmatmul.mubr.f32.gmra.mrb[0].mxu0 %v820
        %v1090 = vpop.f32.mrb[0].mxu0
        %v1091 = vadd.f32 0.0, %v1090
        %v1092 = vpop.f32.mrb[0].mxu0
        %1093 = vmatprep.mubr.f32.mxu0 0.0
        %1094 = vmatmul.mubr.f32.gmra.mrb[0].mxu0 %v823
        %v1095 = vpop.f32.mrb[0].mxu0
        %v1096 = vadd.f32 0.0, %v1095
        %v1097 = vpop.f32.mrb[0].mxu0
        %1098 = vmatprep.mubr.f32.mxu0 0.0
        %1099 = vmatmul.mubr.f32.gmra.mrb[0].mxu0 %v826
        %v1100 = vpop.f32.mrb[0].mxu0
        %v1101 = vadd.f32 0.0, %v1100
        %v1102 = vpop.f32.mrb[0].mxu0
        %1103 = vmatprep.mubr.f32.mxu0 0.0
        %1104 = vmatmul.mubr.f32.gmra.mrb[0].mxu0 %v829
        %v1105 = vpop.f32.mrb[0].mxu0
        %v1106 = vadd.f32 0.0, %v1105
        %v1107 = vpop.f32.mrb[0].mxu0
        %1108 = vmatprep.mubr.f32.mxu0 0.0
        %1109 = vmatmul.mubr.f32.gmra.mrb[0].mxu0 %v832
        %v1110 = vpop.f32.mrb[0].mxu0
        %v1111 = vadd.f32 0.0, %v1110
        %v1112 = vpop.f32.mrb[0].mxu0
        %1113 = vmatprep.mubr.f32.mxu0 0.0
        %1114 = vmatmul.mubr.f32.gmra.mrb[0].mxu0 %v835
        %v1115 = vpop.f32.mrb[0].mxu0
        %v1116 = vadd.f32 0.0, %v1115
        %v1117 = vpop.f32.mrb[0].mxu0
        %1118 = vmatprep.mubr.f32.mxu0 0.0
        %1119 = vmatmul.mubr.f32.gmra.mrb[0].mxu0 %v838
        %v1120 = vpop.f32.mrb[0].mxu0
        %v1121 = vadd.f32 0.0, %v1120
        %v1122 = vpop.f32.mrb[0].mxu0
        %1123 = vmatprep.mubr.f32.mxu0 0.0
        %1124 = vmatmul.mubr.f32.gmra.mrb[0].mxu0 %v841
        %v1125 = vpop.f32.mrb[0].mxu0
        %v1126 = vadd.f32 0.0, %v1125
        %v1127 = vpop.f32.mrb[0].mxu0
        %1128 = vmatprep.mubr.f32.mxu0 0.0
        %1129 = vmatmul.mubr.f32.gmra.mrb[0].mxu0 %v844
        %v1130 = vpop.f32.mrb[0].mxu0
        %v1131 = vadd.f32 0.0, %v1130
        %v1132 = vpop.f32.mrb[0].mxu0
        %1133 = vmatprep.mubr.f32.mxu0 0.0
        %1134 = vmatmul.mubr.f32.gmra.mrb[0].mxu0 %v847
        %v1135 = vpop.f32.mrb[0].mxu0
        %v1136 = vadd.f32 0.0, %v1135
        %v1137 = vpop.f32.mrb[0].mxu0
        %1138 = vmatprep.mubr.f32.mxu0 0.0
        %1139 = vmatmul.mubr.f32.gmra.mrb[0].mxu0 %v850
        %v1140 = vpop.f32.mrb[0].mxu0
        %v1141 = vadd.f32 0.0, %v1140
        %v1142 = vpop.f32.mrb[0].mxu0
        %1143 = vmatprep.mubr.f32.mxu0 0.0
        %1144 = vmatmul.mubr.f32.gmra.mrb[0].mxu0 %v853
        %v1145 = vpop.f32.mrb[0].mxu0
        %v1146 = vadd.f32 0.0, %v1145
        %v1147 = vpop.f32.mrb[0].mxu0
        %1148 = vmatprep.mubr.f32.mxu0 0.0
        %1149 = vmatmul.mubr.f32.gmra.mrb[0].mxu0 %v856
        %v1150 = vpop.f32.mrb[0].mxu0
        %v1151 = vadd.f32 0.0, %v1150
        %v1152 = vpop.f32.mrb[0].mxu0
        %1153 = vmatprep.mubr.f32.mxu0 0.0
        %1154 = vmatmul.mubr.f32.gmra.mrb[0].mxu0 %v859
        %v1155 = vpop.f32.mrb[0].mxu0
        %v1156 = vadd.f32 0.0, %v1155
        %v1157 = vpop.f32.mrb[0].mxu0
        %1158 = vmatprep.mubr.f32.mxu0 0.0
        %1159 = vmatmul.mubr.f32.gmra.mrb[0].mxu0 %v862
        %v1160 = vpop.f32.mrb[0].mxu0
        %v1161 = vadd.f32 0.0, %v1160
        %v1162 = vpop.f32.mrb[0].mxu0
        %1163 = vmatprep.mubr.f32.mxu0 0.0
        %1164 = vmatmul.mubr.f32.gmra.mrb[0].mxu0 %v865
        %v1165 = vpop.f32.mrb[0].mxu0
        %v1166 = vadd.f32 0.0, %v1165
        %v1167 = vpop.f32.mrb[0].mxu0
        %1168 = vmatprep.mubr.f32.mxu0 0.0
        %1169 = vmatmul.mubr.f32.gmra.mrb[0].mxu0 %v868
        %v1170 = vpop.f32.mrb[0].mxu0
        %v1171 = vadd.f32 0.0, %v1170
        %v1172 = vpop.f32.mrb[0].mxu0
        %1173 = vdwg.mxu0
        %v1174 = vld [vmem:[%s1] sm:$0xf]
        %v1175 = vld [vmem:[%s1 + $0x8] sm:$0xf]
        %v1176 = vmul.f32 %v946, %v1061
        %v1177 = vmul.f32 %v951, %v1066
        %v1178 = vmul.f32 %v956, %v1071
        %v1179 = vmul.f32 %v961, %v1076
        %v1180 = vmul.f32 %v966, %v1081
        %v1181 = vmul.f32 %v971, %v1086
        %v1182 = vmul.f32 %v976, %v1091
        %v1183 = vmul.f32 %v981, %v1096
        %v1184 = vmul.f32 %v986, %v1101
        %v1185 = vmul.f32 %v991, %v1106
        %v1186 = vmul.f32 %v996, %v1111
        %v1187 = vmul.f32 %v1001, %v1116
        %v1188 = vmul.f32 %v1006, %v1121
        %v1189 = vmul.f32 %v1011, %v1126
        %v1190 = vmul.f32 %v1016, %v1131
        %v1191 = vmul.f32 %v1021, %v1136
        %v1192 = vmul.f32 %v1026, %v1141
        %v1193 = vmul.f32 %v1031, %v1146
        %v1194 = vmul.f32 %v1036, %v1151
        %v1195 = vmul.f32 %v1041, %v1156
        %v1196 = vmul.f32 %v1046, %v1161
        %v1197 = vmul.f32 %v1051, %v1166
        %v1198 = vmul.f32 %v1056, %v1171
        %1201 = vrot.lane.b32.xlu0 %v1174, 96
        %v1202 = vpop.permute.xlu0 %1201
        %1203 = vrot.lane.b32.xlu0 %v1175, 96
        %v1204 = vpop.permute.xlu0 %1203
        %vm1205 = vcmask 785408
        %v1206 = vsel %vm1205, %v1202, %v1204
        %vm1208 = vcmask 424960
        %v1209 = vsel %vm1208, %v1204, 0
        %v1212 = vsel %vm870, %v1198, 0
        %1214 = vmatprep.subr.mxu0 0.0
        %1215 = vmatpush1.msra.mxu0 %v1176
        %1216 = vmatprep.subr.mxu0 0.0
        %1217 = vmatpush1.msra.mxu0 %v1177
        %1218 = vmatprep.subr.mxu0 0.0
        %1219 = vmatpush1.msra.mxu0 %v1178
        %1220 = vmatprep.subr.mxu0 0.0
        %1221 = vmatpush1.msra.mxu0 %v1179
        %1222 = vmatprep.subr.mxu0 0.0
        %1223 = vmatpush1.msra.mxu0 %v1180
        %1224 = vmatprep.subr.mxu0 0.0
        %1225 = vmatpush1.msra.mxu0 %v1181
        %1226 = vmatprep.subr.mxu0 0.0
        %1227 = vmatpush1.msra.mxu0 %v1182
        %1228 = vmatprep.subr.mxu0 0.0
        %1229 = vmatpush1.msra.mxu0 %v1183
        %1230 = vmatprep.subr.mxu0 0.0
        %1231 = vmatpush1.msra.mxu0 %v1184
        %1232 = vmatprep.subr.mxu0 0.0
        %1233 = vmatpush1.msra.mxu0 %v1185
        %1234 = vmatprep.subr.mxu0 0.0
        %1235 = vmatpush1.msra.mxu0 %v1186
        %1236 = vmatprep.subr.mxu0 0.0
        %1237 = vmatpush1.msra.mxu0 %v1187
        %1238 = vmatprep.subr.mxu0 0.0
        %1239 = vmatpush1.msra.mxu0 %v1188
        %1240 = vmatprep.subr.mxu0 0.0
        %1241 = vmatpush1.msra.mxu0 %v1189
        %1242 = vmatprep.subr.mxu0 0.0
        %1243 = vmatpush1.msra.mxu0 %v1190
        %1244 = vmatprep.subr.mxu0 0.0
        %1245 = vmatpush1.msra.mxu0 %v1191
        %1246 = vmatprep.subr.mxu0 0.0
        %1247 = vmatpush1.msra.mxu0 %v1192
        %1248 = vmatprep.subr.mxu0 0.0
        %1249 = vmatpush1.msra.mxu0 %v1193
        %1250 = vmatprep.subr.mxu0 0.0
        %1251 = vmatpush1.msra.mxu0 %v1194
        %1252 = vmatprep.subr.mxu0 0.0
        %1253 = vmatpush1.msra.mxu0 %v1195
        %1254 = vmatprep.subr.mxu0 0.0
        %1255 = vmatpush1.msra.mxu0 %v1196
        %1256 = vmatprep.subr.mxu0 0.0
        %1257 = vmatpush1.msra.mxu0 %v1197
        %1258 = vmatprep.subr.mxu0 0.0
        %1259 = vmatpush1.msra.mxu0 %v1212
        %1260 = vmatprep.subr.mxu0 0.0
        %1261 = vmatpush1.msra.mxu0 0.0
        %1262 = vmatprep.subr.mxu0 0.0
        %1263 = vmatpush1.msra.mxu0 0.0
        %1264 = vmatprep.subr.mxu0 0.0
        %1265 = vmatpush1.msra.mxu0 0.0
        %1266 = vmatprep.subr.mxu0 0.0
        %1267 = vmatpush1.msra.mxu0 0.0
        %1268 = vmatprep.subr.mxu0 0.0
        %1269 = vmatpush1.msra.mxu0 0.0
        %1270 = vmatprep.subr.mxu0 0.0
        %1271 = vmatpush1.msra.mxu0 0.0
        %1272 = vmatprep.subr.mxu0 0.0
        %1273 = vmatpush1.msra.mxu0 0.0
        %1274 = vmatprep.subr.mxu0 0.0
        %1275 = vmatpush1.msra.mxu0 0.0
        %1276 = vmatprep.subr.mxu0 0.0
        %1277 = vmatpush1.msra.mxu0 0.0
        %1278 = vmatprep.mubr.f32.mxu0 %v1209
        %1279 = vmatmul.mubr.f32.gmra.mrb[0].mxu0 %v1206
        %v1280 = vpop.f32.mrb[0].mxu0
        %v1281 = vadd.f32 0.0, %v1280
        %v1282 = vpop.f32.mrb[0].mxu0
        %1283 = vdwg.mxu0
        %v1284 = vadd.f32 %v941, %v1281
        %v1285 = vld [vmem:[%s1 + $0x8] sm:$0xff]
        %v1286 = vld [vmem:[%s1 + $0x18] sm:$0xff]
        %v1287 = vmax.f32 %v1284, 0.0
        %1289 = vset.pattern.permute.xlu0 95
        %1290 = vperm.xlu0 %1289, %v1285
        %v1291 = vpop.permute.xlu0 %1290
        %1294 = vset.pattern.permute.xlu0 95
        %1295 = vperm.xlu0 %1294, %v1286
        %v1296 = vpop.permute.xlu0 %1295
        %1298 = vrot.lane.b32.xlu0 %v1285, 44
        %v1299 = vpop.permute.xlu0 %1298
        %1300 = vrot.lane.b32.xlu0 %v1286, 44
        %v1301 = vpop.permute.xlu0 %1300
        %vm1302 = vcmask 31744
        %v1303 = vsel %vm1302, %v1299, 0
        %v1305 = vsel %vm1302, %v1301, 0
        %v1308 = vsel %vm870, %v1287, 0
        %1310 = vmatprep.subr.mxu0 0.0
        %1311 = vmatpush1.msra.mxu0 %v1308
        %1312 = vmatprep.subr.mxu0 0.0
        %1313 = vmatpush1.msra.mxu0 0.0
        %1314 = vmatprep.subr.mxu0 0.0
        %1315 = vmatpush1.msra.mxu0 0.0
        %1316 = vmatprep.subr.mxu0 0.0
        %1317 = vmatpush1.msra.mxu0 0.0
        %1318 = vmatprep.subr.mxu0 0.0
        %1319 = vmatpush1.msra.mxu0 0.0
        %1320 = vmatprep.subr.mxu0 0.0
        %1321 = vmatpush1.msra.mxu0 0.0
        %1322 = vmatprep.subr.mxu0 0.0
        %1323 = vmatpush1.msra.mxu0 0.0
        %1324 = vmatprep.subr.mxu0 0.0
        %1325 = vmatpush1.msra.mxu0 0.0
        %1326 = vmatprep.subr.mxu0 0.0
        %1327 = vmatpush1.msra.mxu0 0.0
        %1328 = vmatprep.subr.mxu0 0.0
        %1329 = vmatpush1.msra.mxu0 0.0
        %1330 = vmatprep.subr.mxu0 0.0
        %1331 = vmatpush1.msra.mxu0 0.0
        %1332 = vmatprep.subr.mxu0 0.0
        %1333 = vmatpush1.msra.mxu0 0.0
        %1334 = vmatprep.subr.mxu0 0.0
        %1335 = vmatpush1.msra.mxu0 0.0
        %1336 = vmatprep.subr.mxu0 0.0
        %1337 = vmatpush1.msra.mxu0 0.0
        %1338 = vmatprep.subr.mxu0 0.0
        %1339 = vmatpush1.msra.mxu0 0.0
        %1340 = vmatprep.subr.mxu0 0.0
        %1341 = vmatpush1.msra.mxu0 0.0
        %1342 = vmatprep.subr.mxu0 0.0
        %1343 = vmatpush1.msra.mxu0 0.0
        %1344 = vmatprep.subr.mxu0 0.0
        %1345 = vmatpush1.msra.mxu0 0.0
        %1346 = vmatprep.subr.mxu0 0.0
        %1347 = vmatpush1.msra.mxu0 0.0
        %1348 = vmatprep.subr.mxu0 0.0
        %1349 = vmatpush1.msra.mxu0 0.0
        %1350 = vmatprep.subr.mxu0 0.0
        %1351 = vmatpush1.msra.mxu0 0.0
        %1352 = vmatprep.subr.mxu0 0.0
        %1353 = vmatpush1.msra.mxu0 0.0
        %1354 = vmatprep.subr.mxu0 0.0
        %1355 = vmatpush1.msra.mxu0 0.0
        %1356 = vmatprep.subr.mxu0 0.0
        %1357 = vmatpush1.msra.mxu0 0.0
        %1358 = vmatprep.subr.mxu0 0.0
        %1359 = vmatpush1.msra.mxu0 0.0
        %1360 = vmatprep.subr.mxu0 0.0
        %1361 = vmatpush1.msra.mxu0 0.0
        %1362 = vmatprep.subr.mxu0 0.0
        %1363 = vmatpush1.msra.mxu0 0.0
        %1364 = vmatprep.subr.mxu0 0.0
        %1365 = vmatpush1.msra.mxu0 0.0
        %1366 = vmatprep.subr.mxu0 0.0
        %1367 = vmatpush1.msra.mxu0 0.0
        %1368 = vmatprep.subr.mxu0 0.0
        %1369 = vmatpush1.msra.mxu0 0.0
        %1370 = vmatprep.subr.mxu0 0.0
        %1371 = vmatpush1.msra.mxu0 0.0
        %1372 = vmatprep.subr.mxu0 0.0
        %1373 = vmatpush1.msra.mxu0 0.0
        %1374 = vmatprep.mubr.f32.mxu0 0.0
        %1375 = vmatmul.mubr.f32.gmra.mrb[0].mxu0 %v1303
        %v1376 = vpop.f32.mrb[0].mxu0
        %v1377 = vadd.f32 %v1291, %v1376
        %v1378 = vpop.f32.mrb[0].mxu0
        %1379 = vmatprep.mubr.f32.mxu0 0.0
        %1380 = vmatmul.mubr.f32.gmra.mrb[0].mxu0 %v1305
        %v1381 = vpop.f32.mrb[0].mxu0
        %v1382 = vadd.f32 %v1296, %v1381
        %v1383 = vpop.f32.mrb[0].mxu0
        %1384 = vdwg.mxu0
        %v1385 = vxor.u32 %v1377, 2147483648
        %v1386 = vxor.u32 %v1382, 2147483648
        %v1387 = vmul.f32 %v1385, 1.442695
        %v1388 = vpow.pop %v1387
        %v1389 = vmul.f32 %v1386, 1.442695
        %v1390 = vpow.pop %v1389
        %v1391 = vadd.f32 %v1388, 1.0
        %v1392 = vadd.f32 %v1390, 1.0
        %v1393 = vrcp.pop %v1391
        %v1394 = vmul.f32 1.0, %v1393
        %v1395 = vrcp.pop %v1392
        %v1396 = vmul.f32 1.0, %v1395
        %v1397 = vadd.f32 %v229, %v230
        %1398 = vadd.xlane.f32.xlu0 %v1397
        %v1399 = vpop.xlane.xlu0 %1398
        %v1400 = vadd.f32 %v231, %v232
        %1401 = vadd.xlane.f32.xlu0 %v1400
        %v1402 = vpop.xlane.xlu0 %1401
        %v1403 = vadd.f32 %v233, %v234
        %1404 = vadd.xlane.f32.xlu0 %v1403
        %v1405 = vpop.xlane.xlu0 %1404
        %v1406 = vadd.f32 %v235, %v236
        %1407 = vadd.xlane.f32.xlu0 %v1406
        %v1408 = vpop.xlane.xlu0 %1407
        %v1409 = vrcp.pop 256.0
        %v1410 = vmul.f32 %v1399, %v1409
        %v1411 = vmul.f32 %v1402, %v1409
        %v1412 = vmul.f32 %v1405, %v1409
        %v1413 = vmul.f32 %v1408, %v1409
        %vm1414 = vcmask 7168
        %v1415 = vsel %vm1414, %v1410, %v1412
        %v1416 = vsel %vm1414, %v1411, %v1413
        %v1417 = vld [vmem:[%s1] sm:$0xf]
        %1418 = vset.pattern.permute.xlu0 96
        %1419 = vperm.xlu0 %1418, %v1175
        %v1420 = vpop.permute.xlu0 %1419
        %1423 = vrot.lane.b32.xlu0 %v1417, 112
        %v1424 = vpop.permute.xlu0 %1423
        %v1425 = vsel %vm406, %v1424, 0
        %1427 = vmatprep.subr.mxu0 0.0
        %1428 = vmatpush1.msra.mxu0 %v1415
        %1429 = vmatprep.subr.mxu0 0.0
        %1430 = vmatpush1.msra.mxu0 %v1416
        %1431 = vmatprep.subr.mxu0 0.0
        %1432 = vmatpush1.msra.mxu0 0.0
        %1433 = vmatprep.subr.mxu0 0.0
        %1434 = vmatpush1.msra.mxu0 0.0
        %1435 = vmatprep.subr.mxu0 0.0
        %1436 = vmatpush1.msra.mxu0 0.0
        %1437 = vmatprep.subr.mxu0 0.0
        %1438 = vmatpush1.msra.mxu0 0.0
        %1439 = vmatprep.subr.mxu0 0.0
        %1440 = vmatpush1.msra.mxu0 0.0
        %1441 = vmatprep.subr.mxu0 0.0
        %1442 = vmatpush1.msra.mxu0 0.0
        %1443 = vmatprep.subr.mxu0 0.0
        %1444 = vmatpush1.msra.mxu0 0.0
        %1445 = vmatprep.subr.mxu0 0.0
        %1446 = vmatpush1.msra.mxu0 0.0
        %1447 = vmatprep.subr.mxu0 0.0
        %1448 = vmatpush1.msra.mxu0 0.0
        %1449 = vmatprep.subr.mxu0 0.0
        %1450 = vmatpush1.msra.mxu0 0.0
        %1451 = vmatprep.subr.mxu0 0.0
        %1452 = vmatpush1.msra.mxu0 0.0
        %1453 = vmatprep.subr.mxu0 0.0
        %1454 = vmatpush1.msra.mxu0 0.0
        %1455 = vmatprep.subr.mxu0 0.0
        %1456 = vmatpush1.msra.mxu0 0.0
        %1457 = vmatprep.subr.mxu0 0.0
        %1458 = vmatpush1.msra.mxu0 0.0
        %1459 = vmatprep.subr.mxu0 0.0
        %1460 = vmatpush1.msra.mxu0 0.0
        %1461 = vmatprep.subr.mxu0 0.0
        %1462 = vmatpush1.msra.mxu0 0.0
        %1463 = vmatprep.subr.mxu0 0.0
        %1464 = vmatpush1.msra.mxu0 0.0
        %1465 = vmatprep.subr.mxu0 0.0
        %1466 = vmatpush1.msra.mxu0 0.0
        %1467 = vmatprep.subr.mxu0 0.0
        %1468 = vmatpush1.msra.mxu0 0.0
        %1469 = vmatprep.subr.mxu0 0.0
        %1470 = vmatpush1.msra.mxu0 0.0
        %1471 = vmatprep.subr.mxu0 0.0
        %1472 = vmatpush1.msra.mxu0 0.0
        %1473 = vmatprep.subr.mxu0 0.0
        %1474 = vmatpush1.msra.mxu0 0.0
        %1475 = vmatprep.subr.mxu0 0.0
        %1476 = vmatpush1.msra.mxu0 0.0
        %1477 = vmatprep.subr.mxu0 0.0
        %1478 = vmatpush1.msra.mxu0 0.0
        %1479 = vmatprep.subr.mxu0 0.0
        %1480 = vmatpush1.msra.mxu0 0.0
        %1481 = vmatprep.subr.mxu0 0.0
        %1482 = vmatpush1.msra.mxu0 0.0
        %1483 = vmatprep.subr.mxu0 0.0
        %1484 = vmatpush1.msra.mxu0 0.0
        %1485 = vmatprep.subr.mxu0 0.0
        %1486 = vmatpush1.msra.mxu0 0.0
        %1487 = vmatprep.subr.mxu0 0.0
        %1488 = vmatpush1.msra.mxu0 0.0
        %1489 = vmatprep.subr.mxu0 0.0
        %1490 = vmatpush1.msra.mxu0 0.0
        %1491 = vmatprep.mubr.f32.mxu0 0.0
        %1492 = vmatmul.mubr.f32.gmra.mrb[0].mxu0 %v1425
        %v1493 = vpop.f32.mrb[0].mxu0
        %v1494 = vadd.f32 %v1420, %v1493
        %v1495 = vpop.f32.mrb[0].mxu0
        %1496 = vdwg.mxu0
        %v1497 = vmax.f32 %v1494, 0.0
        %1498 = vset.pattern.permute.xlu0 97
        %1499 = vperm.xlu0 %1498, %v1285
        %v1500 = vpop.permute.xlu0 %1499
        %1502 = vset.pattern.permute.xlu0 97
        %1503 = vperm.xlu0 %1502, %v1286
        %v1504 = vpop.permute.xlu0 %1503
        %1506 = vrot.lane.b32.xlu0 %v1285, 40
        %v1507 = vpop.permute.xlu0 %1506
        %1508 = vrot.lane.b32.xlu0 %v1286, 40
        %v1509 = vpop.permute.xlu0 %1508
        %v1510 = vsel %vm1302, %v1507, 0
        %v1512 = vsel %vm1302, %v1509, 0
        %v1515 = vsel %vm870, %v1497, 0
        %1517 = vmatprep.subr.mxu0 0.0
        %1518 = vmatpush1.msra.mxu0 %v1515
        %1519 = vmatprep.subr.mxu0 0.0
        %1520 = vmatpush1.msra.mxu0 0.0
        %1521 = vmatprep.subr.mxu0 0.0
        %1522 = vmatpush1.msra.mxu0 0.0
        %1523 = vmatprep.subr.mxu0 0.0
        %1524 = vmatpush1.msra.mxu0 0.0
        %1525 = vmatprep.subr.mxu0 0.0
        %1526 = vmatpush1.msra.mxu0 0.0
        %1527 = vmatprep.subr.mxu0 0.0
        %1528 = vmatpush1.msra.mxu0 0.0
        %1529 = vmatprep.subr.mxu0 0.0
        %1530 = vmatpush1.msra.mxu0 0.0
        %1531 = vmatprep.subr.mxu0 0.0
        %1532 = vmatpush1.msra.mxu0 0.0
        %1533 = vmatprep.subr.mxu0 0.0
        %1534 = vmatpush1.msra.mxu0 0.0
        %1535 = vmatprep.subr.mxu0 0.0
        %1536 = vmatpush1.msra.mxu0 0.0
        %1537 = vmatprep.subr.mxu0 0.0
        %1538 = vmatpush1.msra.mxu0 0.0
        %1539 = vmatprep.subr.mxu0 0.0
        %1540 = vmatpush1.msra.mxu0 0.0
        %1541 = vmatprep.subr.mxu0 0.0
        %1542 = vmatpush1.msra.mxu0 0.0
        %1543 = vmatprep.subr.mxu0 0.0
        %1544 = vmatpush1.msra.mxu0 0.0
        %1545 = vmatprep.subr.mxu0 0.0
        %1546 = vmatpush1.msra.mxu0 0.0
        %1547 = vmatprep.subr.mxu0 0.0
        %1548 = vmatpush1.msra.mxu0 0.0
        %1549 = vmatprep.subr.mxu0 0.0
        %1550 = vmatpush1.msra.mxu0 0.0
        %1551 = vmatprep.subr.mxu0 0.0
        %1552 = vmatpush1.msra.mxu0 0.0
        %1553 = vmatprep.subr.mxu0 0.0
        %1554 = vmatpush1.msra.mxu0 0.0
        %1555 = vmatprep.subr.mxu0 0.0
        %1556 = vmatpush1.msra.mxu0 0.0
        %1557 = vmatprep.subr.mxu0 0.0
        %1558 = vmatpush1.msra.mxu0 0.0
        %1559 = vmatprep.subr.mxu0 0.0
        %1560 = vmatpush1.msra.mxu0 0.0
        %1561 = vmatprep.subr.mxu0 0.0
        %1562 = vmatpush1.msra.mxu0 0.0
        %1563 = vmatprep.subr.mxu0 0.0
        %1564 = vmatpush1.msra.mxu0 0.0
        %1565 = vmatprep.subr.mxu0 0.0
        %1566 = vmatpush1.msra.mxu0 0.0
        %1567 = vmatprep.subr.mxu0 0.0
        %1568 = vmatpush1.msra.mxu0 0.0
        %1569 = vmatprep.subr.mxu0 0.0
        %1570 = vmatpush1.msra.mxu0 0.0
        %1571 = vmatprep.subr.mxu0 0.0
        %1572 = vmatpush1.msra.mxu0 0.0
        %1573 = vmatprep.subr.mxu0 0.0
        %1574 = vmatpush1.msra.mxu0 0.0
        %1575 = vmatprep.subr.mxu0 0.0
        %1576 = vmatpush1.msra.mxu0 0.0
        %1577 = vmatprep.subr.mxu0 0.0
        %1578 = vmatpush1.msra.mxu0 0.0
        %1579 = vmatprep.subr.mxu0 0.0
        %1580 = vmatpush1.msra.mxu0 0.0
        %1581 = vmatprep.mubr.f32.mxu0 0.0
        %1582 = vmatmul.mubr.f32.gmra.mrb[0].mxu0 %v1510
        %v1583 = vpop.f32.mrb[0].mxu0
        %v1584 = vadd.f32 %v1500, %v1583
        %v1585 = vpop.f32.mrb[0].mxu0
        %1586 = vmatprep.mubr.f32.mxu0 0.0
        %1587 = vmatmul.mubr.f32.gmra.mrb[0].mxu0 %v1512
        %v1588 = vpop.f32.mrb[0].mxu0
        %v1589 = vadd.f32 %v1504, %v1588
        %v1590 = vpop.f32.mrb[0].mxu0
        %1591 = vdwg.mxu0
        %v1592 = vxor.u32 %v1584, 2147483648
        %v1593 = vxor.u32 %v1589, 2147483648
        %v1594 = vmul.f32 %v1592, 1.442695
        %v1595 = vpow.pop %v1594
        %v1596 = vmul.f32 %v1593, 1.442695
        %v1597 = vpow.pop %v1596
        %v1598 = vadd.f32 %v1595, 1.0
        %v1599 = vadd.f32 %v1597, 1.0
        %v1600 = vrcp.pop %v1598
        %v1601 = vmul.f32 1.0, %v1600
        %v1602 = vrcp.pop %v1599
        %v1603 = vmul.f32 1.0, %v1602
        %vm1604 = vcmask 15360
        %v1605 = vsel %vm1604, %v1601, 0.0
        %v1606 = vsel %vm1604, %v1603, 0.0
        %v1607 = vadd.f32 %v1605, %v1606
        %v1608 = vrot.slane %v1607, 4
        %v1609 = vadd.f32 %v1607, %v1608
        %v1610 = vrot.slane %v1609, 2
        %v1611 = vadd.f32 %v1609, %v1610
        %v1612 = vrot.slane %v1611, 1
        %v1613 = vadd.f32 %v1611, %v1612
        %v1614 = vrcp.pop 16.0
        %v1615 = vmul.f32 %v1613, %v1614
        %v1616 = vsub.f32 %v1615, %v1601
        %v1617 = vsub.f32 %v1615, %v1603
        %v1618 = vmax.f32 %v1616, 0.0
        %v1619 = vmax.f32 %v1617, 0.0
        %v1620 = vsub.f32 %v1615, %v1618
        %v1621 = vsub.f32 %v1615, %v1619
        %v1622 = vld [vmem:[%s4 + $0x20] sm:$0x3]
        %1624 = vrot.lane.b32.xlu0 %v1622, 96
        %v1625 = vpop.permute.xlu0 %1624
        %v1627 = vsel %vm1604, %v1620, 0
        %v1630 = vsel %vm1604, %v1621, 0
        %vm1632 = vcmask 1041408
        %v1633 = vsel %vm1632, %v1625, 0
        %1635 = vmatprep.subr.mxu0 0.0
        %1636 = vmatpush1.msra.mxu0 %v1633
        %1637 = vmatprep.subr.mxu0 0.0
        %1638 = vmatpush1.msra.mxu0 0.0
        %1639 = vmatprep.subr.mxu0 0.0
        %1640 = vmatpush1.msra.mxu0 0.0
        %1641 = vmatprep.subr.mxu0 0.0
        %1642 = vmatpush1.msra.mxu0 0.0
        %1643 = vmatprep.subr.mxu0 0.0
        %1644 = vmatpush1.msra.mxu0 0.0
        %1645 = vmatprep.subr.mxu0 0.0
        %1646 = vmatpush1.msra.mxu0 0.0
        %1647 = vmatprep.subr.mxu0 0.0
        %1648 = vmatpush1.msra.mxu0 0.0
        %1649 = vmatprep.subr.mxu0 0.0
        %1650 = vmatpush1.msra.mxu0 0.0
        %1651 = vmatprep.subr.mxu0 0.0
        %1652 = vmatpush1.msra.mxu0 0.0
        %1653 = vmatprep.subr.mxu0 0.0
        %1654 = vmatpush1.msra.mxu0 0.0
        %1655 = vmatprep.subr.mxu0 0.0
        %1656 = vmatpush1.msra.mxu0 0.0
        %1657 = vmatprep.subr.mxu0 0.0
        %1658 = vmatpush1.msra.mxu0 0.0
        %1659 = vmatprep.subr.mxu0 0.0
        %1660 = vmatpush1.msra.mxu0 0.0
        %1661 = vmatprep.subr.mxu0 0.0
        %1662 = vmatpush1.msra.mxu0 0.0
        %1663 = vmatprep.subr.mxu0 0.0
        %1664 = vmatpush1.msra.mxu0 0.0
        %1665 = vmatprep.subr.mxu0 0.0
        %1666 = vmatpush1.msra.mxu0 0.0
        %1667 = vmatprep.subr.mxu0 0.0
        %1668 = vmatpush1.msra.mxu0 0.0
        %1669 = vmatprep.subr.mxu0 0.0
        %1670 = vmatpush1.msra.mxu0 0.0
        %1671 = vmatprep.subr.mxu0 0.0
        %1672 = vmatpush1.msra.mxu0 0.0
        %1673 = vmatprep.subr.mxu0 0.0
        %1674 = vmatpush1.msra.mxu0 0.0
        %1675 = vmatprep.subr.mxu0 0.0
        %1676 = vmatpush1.msra.mxu0 0.0
        %1677 = vmatprep.subr.mxu0 0.0
        %1678 = vmatpush1.msra.mxu0 0.0
        %1679 = vmatprep.subr.mxu0 0.0
        %1680 = vmatpush1.msra.mxu0 0.0
        %1681 = vmatprep.subr.mxu0 0.0
        %1682 = vmatpush1.msra.mxu0 0.0
        %1683 = vmatprep.subr.mxu0 0.0
        %1684 = vmatpush1.msra.mxu0 0.0
        %1685 = vmatprep.subr.mxu0 0.0
        %1686 = vmatpush1.msra.mxu0 0.0
        %1687 = vmatprep.subr.mxu0 0.0
        %1688 = vmatpush1.msra.mxu0 0.0
        %1689 = vmatprep.subr.mxu0 0.0
        %1690 = vmatpush1.msra.mxu0 0.0
        %1691 = vmatprep.subr.mxu0 0.0
        %1692 = vmatpush1.msra.mxu0 0.0
        %1693 = vmatprep.subr.mxu0 0.0
        %1694 = vmatpush1.msra.mxu0 0.0
        %1695 = vmatprep.subr.mxu0 0.0
        %1696 = vmatpush1.msra.mxu0 0.0
        %1697 = vmatprep.subr.mxu0 0.0
        %1698 = vmatpush1.msra.mxu0 0.0
        %1699 = vmatprep.mubr.f32.mxu0 0.0
        %1700 = vmatmul.mubr.f32.gmra.mrb[0].mxu0 %v1627
        %v1701 = vpop.f32.mrb[0].mxu0
        %v1702 = vadd.f32 0.0, %v1701
        %v1703 = vpop.f32.mrb[0].mxu0
        %1704 = vmatprep.mubr.f32.mxu0 0.0
        %1705 = vmatmul.mubr.f32.gmra.mrb[0].mxu0 %v1630
        %v1706 = vpop.f32.mrb[0].mxu0
        %v1707 = vadd.f32 0.0, %v1706
        %v1708 = vpop.f32.mrb[0].mxu0
        %1709 = vdwg.mxu0
        %v1710 = vadd.f32 %v1702, %v1394
        %v1711 = vadd.f32 %v1707, %v1396
        %v1712 = vmul.f32 %v1702, %v1394
        %v1713 = vmul.f32 %v1707, %v1396
        %v1714 = vsub.f32 %v1710, %v1712
        %v1715 = vsub.f32 %v1711, %v1713
        %1718 = vrot.lane.b32.xlu0 %v1714, 112
        %v1719 = vpop.permute.xlu0 %1718
        %1720 = vrot.lane.b32.xlu0 %v1715, 112
        %v1721 = vpop.permute.xlu0 %1720
        %v1722 = vld [vmem:[%s4 + $0x10] sm:$0xff]
        %v1723 = vld [vmem:[%s4 + $0x18] sm:$0xff]
        %v1724 = vld [vmem:[%s4 + $0x20] sm:$0xff]
        %v1725 = vld [vmem:[%s4 + $0x38] sm:$0xff]
        %v1726 = vld [vmem:[%s4 + $0x40] sm:$0xff]
        %v1727 = vld [vmem:[%s4 + $0x48] sm:$0xff]
        %1734 = vrot.lane.b32.xlu0 %v1722, 96
        %v1735 = vpop.permute.xlu0 %1734
        %1736 = vrot.lane.b32.xlu0 %v1723, 96
        %v1737 = vpop.permute.xlu0 %1736
        %1738 = vrot.lane.b32.xlu0 %v1724, 96
        %v1739 = vpop.permute.xlu0 %1738
        %1740 = vrot.lane.b32.xlu0 %v1725, 96
        %v1741 = vpop.permute.xlu0 %1740
        %1742 = vrot.lane.b32.xlu0 %v1726, 96
        %v1743 = vpop.permute.xlu0 %1742
        %1744 = vrot.lane.b32.xlu0 %v1727, 96
        %v1745 = vpop.permute.xlu0 %1744
        %v1746 = vsel %vm1205, %v1735, %v1737
        %v1747 = vsel %vm1205, %v1737, %v1739
        %v1748 = vsel %vm1205, %v1741, %v1743
        %v1749 = vsel %vm1205, %v1743, %v1745
        %v1754 = vsel %vm406, %v1714, 0
        %v1756 = vsel %vm406, %v1715, 0
        %v1758 = vsel %vm406, %v1719, 0
        %v1760 = vsel %vm406, %v1721, 0
        %1762 = vmatprep.subr.mxu0 %v1747
        %1763 = vmatpush1.msra.mxu0 %v1746
        %1764 = vmatprep.subr.mxu0 %v1749
        %1765 = vmatpush1.msra.mxu0 %v1748
        %1766 = vmatprep.subr.mxu0 0.0
        %1767 = vmatpush1.msra.mxu0 0.0
        %1768 = vmatprep.subr.mxu0 0.0
        %1769 = vmatpush1.msra.mxu0 0.0
        %1770 = vmatprep.subr.mxu0 0.0
        %1771 = vmatpush1.msra.mxu0 0.0
        %1772 = vmatprep.subr.mxu0 0.0
        %1773 = vmatpush1.msra.mxu0 0.0
        %1774 = vmatprep.subr.mxu0 0.0
        %1775 = vmatpush1.msra.mxu0 0.0
        %1776 = vmatprep.subr.mxu0 0.0
        %1777 = vmatpush1.msra.mxu0 0.0
        %1778 = vmatprep.subr.mxu0 0.0
        %1779 = vmatpush1.msra.mxu0 0.0
        %1780 = vmatprep.subr.mxu0 0.0
        %1781 = vmatpush1.msra.mxu0 0.0
        %1782 = vmatprep.subr.mxu0 0.0
        %1783 = vmatpush1.msra.mxu0 0.0
        %1784 = vmatprep.subr.mxu0 0.0
        %1785 = vmatpush1.msra.mxu0 0.0
        %1786 = vmatprep.subr.mxu0 0.0
        %1787 = vmatpush1.msra.mxu0 0.0
        %1788 = vmatprep.subr.mxu0 0.0
        %1789 = vmatpush1.msra.mxu0 0.0
        %1790 = vmatprep.subr.mxu0 0.0
        %1791 = vmatpush1.msra.mxu0 0.0
        %1792 = vmatprep.subr.mxu0 0.0
        %1793 = vmatpush1.msra.mxu0 0.0
        %1794 = vmatprep.subr.mxu0 0.0
        %1795 = vmatpush1.msra.mxu0 0.0
        %1796 = vmatprep.subr.mxu0 0.0
        %1797 = vmatpush1.msra.mxu0 0.0
        %1798 = vmatprep.subr.mxu0 0.0
        %1799 = vmatpush1.msra.mxu0 0.0
        %1800 = vmatprep.subr.mxu0 0.0
        %1801 = vmatpush1.msra.mxu0 0.0
        %1802 = vmatprep.subr.mxu0 0.0
        %1803 = vmatpush1.msra.mxu0 0.0
        %1804 = vmatprep.subr.mxu0 0.0
        %1805 = vmatpush1.msra.mxu0 0.0
        %1806 = vmatprep.subr.mxu0 0.0
        %1807 = vmatpush1.msra.mxu0 0.0
        %1808 = vmatprep.subr.mxu0 0.0
        %1809 = vmatpush1.msra.mxu0 0.0
        %1810 = vmatprep.subr.mxu0 0.0
        %1811 = vmatpush1.msra.mxu0 0.0
        %1812 = vmatprep.subr.mxu0 0.0
        %1813 = vmatpush1.msra.mxu0 0.0
        %1814 = vmatprep.subr.mxu0 0.0
        %1815 = vmatpush1.msra.mxu0 0.0
        %1816 = vmatprep.subr.mxu0 0.0
        %1817 = vmatpush1.msra.mxu0 0.0
        %1818 = vmatprep.subr.mxu0 0.0
        %1819 = vmatpush1.msra.mxu0 0.0
        %1820 = vmatprep.subr.mxu0 0.0
        %1821 = vmatpush1.msra.mxu0 0.0
        %1822 = vmatprep.subr.mxu0 0.0
        %1823 = vmatpush1.msra.mxu0 0.0
        %1824 = vmatprep.subr.mxu0 0.0
        %1825 = vmatpush1.msra.mxu0 0.0
        %1826 = vmatprep.mubr.f32.mxu0 0.0
        %1827 = vmatmul.mubr.f32.gmra.mrb[0].mxu0 %v1754
        %v1828 = vpop.f32.mrb[0].mxu0
        %v1829 = vadd.f32 0.0, %v1828
        %v1830 = vpop.f32.mrb[0].mxu0
        %v1831 = vadd.f32 0.0, %v1830
        %1832 = vmatprep.mubr.f32.mxu0 0.0
        %1833 = vmatmul.mubr.f32.gmra.mrb[0].mxu0 %v1756
        %v1834 = vpop.f32.mrb[0].mxu0
        %v1835 = vadd.f32 0.0, %v1834
        %v1836 = vpop.f32.mrb[0].mxu0
        %v1837 = vadd.f32 0.0, %v1836
        %1838 = vmatprep.mubr.f32.mxu0 0.0
        %1839 = vmatmul.mubr.f32.gmra.mrb[0].mxu0 %v1758
        %v1840 = vpop.f32.mrb[0].mxu0
        %v1841 = vadd.f32 0.0, %v1840
        %v1842 = vpop.f32.mrb[0].mxu0
        %v1843 = vadd.f32 0.0, %v1842
        %1844 = vmatprep.mubr.f32.mxu0 0.0
        %1845 = vmatmul.mubr.f32.gmra.mrb[0].mxu0 %v1760
        %v1846 = vpop.f32.mrb[0].mxu0
        %v1847 = vadd.f32 0.0, %v1846
        %v1848 = vpop.f32.mrb[0].mxu0
        %v1849 = vadd.f32 0.0, %v1848
        %1850 = vdwg.mxu0
        %v1851 = vmul.f32 %v229, %v1829
        %v1852 = vmul.f32 %v230, %v1831
        %v1853 = vmul.f32 %v231, %v1835
        %v1854 = vmul.f32 %v232, %v1837
        %v1855 = vmul.f32 %v233, %v1841
        %v1856 = vmul.f32 %v234, %v1843
        %v1857 = vmul.f32 %v235, %v1847
        %v1858 = vmul.f32 %v236, %v1849
        %1859 = vst [vmem:[%s220] sm:$0xff] %v1851
        %1860 = vst [vmem:[%s220 + $0x8] sm:$0xff] %v1852
        %1861 = vst [vmem:[%s220 + $0x10] sm:$0xff] %v1853
        %1862 = vst [vmem:[%s220 + $0x18] sm:$0xff] %v1854
        %1863 = vst [vmem:[%s220 + $0x20] sm:$0xff] %v1855
        %1864 = vst [vmem:[%s220 + $0x28] sm:$0xff] %v1856
        %1865 = vst [vmem:[%s220 + $0x30] sm:$0xff] %v1857
        %1866 = vst [vmem:[%s220 + $0x38] sm:$0xff] %v1858
        %s1867 = sand.u32 %s137, 1
        %s1868 = scalar_lea.sflag [#allocation4], %s1867
        %s1869 = sand.u32 %s137, 1
        %s1870 = smul.addr %s1869, 64
        %s1871 = scalar_lea.vmem [#allocation3], %s1870
        // Predicated region
        $region41: #{tpu_custom_call.1} parent=39 // pred_check
          %p1872 = pneg %p147
        $region42: #{tpu_custom_call.1} parent=39 // pred_check_branch
          %1874 = sbr.rel (%p1872) target = $region44
        $region43: #{tpu_custom_call.1} parent=39 // pred_region
          %s1875 = smul.u32 2, %s19
          %s1877 = ssub.s32 1024, 1024
          %1878 = vsyncadd %s1868, %s1877
          %s1879 = smul.addr %s1875, 4
          %s1880 = smul.addr %s1879, 128
          %s1881 = scalar_lea.hbm %s5, %s1880
          %s1882 = sshll.u32 %s1871, 4
          %s1883 = int_to_ptr.vmem [resolvable:$true] %s1882
          %1888 = dma.vmem_to_hbm [thread:$0]  %s1883, 1024, %s1881, %s1868, 256, 256, 16
        $region44: #{tpu_custom_call.1} parent=39 // pred_fallthru
          _
      $region40: #{tpu_custom_call.1} parent=5 // pred_fallthru
        _
      %p1889 = scmp.le.s32.totalorder 2, %s14
      // Predicated region
      $region45: #{tpu_custom_call.1} parent=5 // pred_check
        %p1890 = pneg %p1889
      $region46: #{tpu_custom_call.1} parent=5 // pred_check_branch
        %1892 = sbr.rel (%p1890) target = $region48
      $region47: #{tpu_custom_call.1} parent=5 // pred_region
        %s1893 = ssub.s32 %s14, 2
        // Predicated region
        $region49: #{tpu_custom_call.1} parent=47 // pred_check
          %p1894 = pneg %p153
        $region50: #{tpu_custom_call.1} parent=47 // pred_check_branch
          %1896 = sbr.rel (%p1894) target = $region52
        $region51: #{tpu_custom_call.1} parent=47 // pred_region
          %s1897 = sand.u32 %s138, 1
          %s1898 = scalar_lea.sflag [#allocation4], %s1897
          %s1899 = sand.u32 %s138, 1
          %s1900 = smul.addr %s1899, 64
          %s1901 = scalar_lea.vmem [#allocation3], %s1900
          %1902 = dma.done %s1898, 1024
        $region52: #{tpu_custom_call.1} parent=47 // pred_fallthru
          _
      $region48: #{tpu_custom_call.1} parent=5 // pred_fallthru
        _
    $region6: #{tpu_custom_call.1} parent=1 // loop_footer
      %s18 = sadd.s32 1, %s14
    $region7: #{tpu_custom_call.1} parent=1 // loop_footer_branch
      %13 = sbr.rel target = $region3
    $region8: #{tpu_custom_call.1} parent=1 // loop_exit
      _
    %1903 = vsyncpa [#allocation4], 1
    %s1904 = scalar_lea.sflag [#allocation4], 1
    %1905 = vsyncpa %s1904, 1

</llo_original>
